<compile_context>
chip_gen: v5e
topology: v5e:2x2
jax: 0.10.0
libtpu: 0.0.40
codegen_flags: <defaults>
</compile_context>

<pallas_src>
import functools

import jax
import jax.numpy as jnp
from jax.experimental import pallas as pl
from jax.experimental.pallas import tpu as pltpu


LANE = 128          # TPU lane width; feature dims padded to a multiple of it.
LN_EPS = 1e-6       # matches the hand-rolled LayerNorm used in BERT4Rec impls.


def _round_up(n, m):
    return ((n + m - 1) // m) * m


def _gelu(x):
    # tanh-approximated GELU (hand-rolled GELU of reference BERT4Rec).
    return 0.5 * x * (1.0 + jnp.tanh(0.7978845608028654 * (x + 0.044715 * x * x * x)))


def _layer_norm(x, g, b, inv_n, eps, valid_mask):
    # Two-pass variance.  Padded lanes of x are zero and padded gamma/beta are
    # zero, so padded output lanes stay exactly zero; only the variance sum
    # needs masking (x - mu is -mu, not zero, on padded lanes).
    mu = jnp.sum(x, axis=-1, keepdims=True) * inv_n
    xc = x - mu
    xv = xc if valid_mask is None else jnp.where(valid_mask, xc, 0.0)
    var = jnp.sum(xv * xv, axis=-1, keepdims=True) * inv_n
    return xc * jax.lax.rsqrt(var + eps) * g + b


# ----------------------------- Pallas kernel --------------------------------

def bert_stack_kernel(num_head, head_dim, valid_e, tb, seq, eps,
                      x_hbm, wqkv_ref, wo_ref, w1_ref, w2_ref, vec_ref,
                      o_ref, ctx_ref, sem_ref):
    """grid = (batch_tiles, layers): one encoder layer per step; the activation
    for the current batch tile is carried in o_ref (resident across layers)."""
    bi = pl.program_id(0)
    l = pl.program_id(1)
    rt, Ep = o_ref.shape                       # rt = tb * seq padded-row tile
    Fp = w1_ref.shape[-1]
    H, dh = num_head, head_dim
    scale = 1.0 / (dh ** 0.5)
    inv_n = 1.0 / valid_e

    @pl.when(l == 0)
    def _():
        # Pull this batch tile's embeddings straight from HBM into the resident
        # output block (no streamed full-size x input block held in VMEM).
        row0 = bi * rt
        if rt % 8 == 0:
            row0 = pl.multiple_of(row0, 8)
        cp = pltpu.make_async_copy(x_hbm.at[pl.ds(row0, rt), :], o_ref,
                                   sem_ref.at[0])
        cp.start()
        cp.wait()
        if Ep != valid_e:
            # Padded columns of the ctx slab must never hold NaN garbage
            # (0 * NaN = NaN in the output projection).
            ctx_ref[...] = jnp.zeros_like(ctx_ref)

    x = o_ref[...]                                           # (rt, Ep) f32
    if Ep == valid_e:
        valid_mask = None
    else:
        lane = jax.lax.broadcasted_iota(jnp.int32, (1, Ep), 1)
        valid_mask = lane < valid_e

    # ---- per-layer vectors: one merged (1, 9*Ep+Fp) block = one small DMA ----
    bqkv = vec_ref[0, :, 0:3 * Ep]
    bo = vec_ref[0, :, 3 * Ep:4 * Ep]
    ln1g = vec_ref[0, :, 4 * Ep:5 * Ep]
    ln1b = vec_ref[0, :, 5 * Ep:6 * Ep]
    b1 = vec_ref[0, :, 6 * Ep:6 * Ep + Fp]
    b2 = vec_ref[0, :, 6 * Ep + Fp:7 * Ep + Fp]
    ln2g = vec_ref[0, :, 7 * Ep + Fp:8 * Ep + Fp]
    ln2b = vec_ref[0, :, 8 * Ep + Fp:9 * Ep + Fp]

    # ---- fused dense QKV projection: (rt, Ep) @ (Ep, 3*Ep), no head padding ----
    xb = x.astype(jnp.bfloat16)
    qkv = jnp.dot(xb, wqkv_ref[0], preferred_element_type=jnp.float32) + bqkv
    qkv = qkv.reshape(tb, seq, 3 * Ep)        # leading-axis split (layout-free)

    # ---- multi-head self-attention --------------------------------------------
    # Mosaic dot_general supports one batch dim, so batch over the batch tile
    # per einsum and statically unroll the (small) head loop.  Each head's
    # context tile is written into its dh-wide slice of the ctx slab; the
    # output projection is then a single dense dot.
    # TODO(synk): if the 'bqd,bkd->bqk' lowering shows per-(batch,head) K
    #             transposes at production sizes, transpose K once per layer.
    for h in range(H):
        off = h * dh
        qh = qkv[:, :, off:off + dh].astype(jnp.bfloat16)               # (tb,S,dh)
        kh = qkv[:, :, Ep + off:Ep + off + dh].astype(jnp.bfloat16)
        vh = qkv[:, :, 2 * Ep + off:2 * Ep + off + dh].astype(jnp.bfloat16)
        s = jnp.einsum('bqd,bkd->bqk', qh, kh,
                       preferred_element_type=jnp.float32) * scale       # (tb,S,S)
        s = s - jnp.max(s, axis=-1, keepdims=True)
        p = jnp.exp(s)
        p = p * pl.reciprocal(jnp.sum(p, axis=-1, keepdims=True), approx=True)
        ctx = jnp.einsum('bqk,bkd->bqd', p.astype(jnp.bfloat16), vh,
                         preferred_element_type=jnp.float32)             # (tb,S,dh)
        ctx_ref[:, off:off + dh] = ctx.reshape(rt, dh)

    # Single (rt, Ep) @ (Ep, Ep) output projection (replaces per-head K-dots).
    attn = jnp.dot(ctx_ref[...].astype(jnp.bfloat16), wo_ref[0],
                   preferred_element_type=jnp.float32) + bo

    x1 = _layer_norm(x + attn, ln1g, ln1b, inv_n, eps, valid_mask)

    # ---- position-wise feed-forward --------------------------------------------
    h1 = jnp.dot(x1.astype(jnp.bfloat16), w1_ref[0],
                 preferred_element_type=jnp.float32) + b1
    h1 = _gelu(h1)                                  # f32 elementwise (v5e-safe)
    h2 = jnp.dot(h1.astype(jnp.bfloat16), w2_ref[0],
                 preferred_element_type=jnp.float32) + b2

    o_ref[...] = _layer_norm(x1 + h2, ln2g, ln2b, inv_n, eps, valid_mask)


# ------------------------------ wrapper ---------------------------------------

def transformer_stack(x, packed, *, num_head, valid_e, batch, seq):
    """x: (R, Ep) f32 padded activations, R = batch*seq.  One pallas_call."""
    R, Ep = x.shape
    n_layers = packed["wqkv"].shape[0]

    # Batch-tile axis: one sequence per tile when the row count is sublane-
    # aligned, otherwise fall back to a single tile over the whole batch.
    tb = 1 if (seq % 8 == 0) else batch
    n_bt = batch // tb
    rt = tb * seq

    def wspec(a):
        # one layer's slice per grid step; auto double-buffering prefetches l+1.
        return pl.BlockSpec((1,) + a.shape[1:], lambda bi, l: (l, 0, 0))

    weight_names = ("wqkv", "wo", "w1", "w2", "vec")
    in_specs = [pl.BlockSpec(memory_space=pl.ANY)]       # embeddings stay in HBM
    in_specs += [wspec(packed[n]) for n in weight_names]

    kernel = functools.partial(
        bert_stack_kernel, num_head, valid_e // num_head, valid_e, tb, seq, LN_EPS)

    return pl.pallas_call(
        kernel,
        out_shape=jax.ShapeDtypeStruct((R, Ep), jnp.float32),
        grid_spec=pltpu.PrefetchScalarGridSpec(
            num_scalar_prefetch=0,
            grid=(n_bt, n_layers),
            in_specs=in_specs,
            # block index depends only on the batch tile -> activation stays
            # resident in VMEM across the layer axis.
            out_specs=pl.BlockSpec((rt, Ep), lambda bi, l: (bi, 0)),
            scratch_shapes=[
                pltpu.VMEM((rt, Ep), jnp.float32),       # per-head ctx slab
                pltpu.SemaphoreType.DMA((1,)),           # embedding-load DMA sem
            ],
        ),
        compiler_params=pltpu.CompilerParams(
            dimension_semantics=("parallel", "arbitrary"),
            # Defaults (16/32 MiB) are below production per-layer weight working
            # sets; 48 MiB fits every generation's physical VMEM (v7x: 64 MiB).
            vmem_limit_bytes=48 * 1024 * 1024,
        ),
    )(x, *(packed[n] for n in weight_names))


# ------------------------------ parameter packing ----------------------------

def pack_params(params):
    """Repack reference-layout f32 params into the kernel layout:
       - stacked over layers (leading L dim), matmul weights in bf16,
       - feature dims zero-padded to multiples of 128 (no per-head padding),
       - Q|K|V weights fused column-wise, all small vectors merged into one
         (L, 1, 9*Ep+Fp) f32 array."""
    E = params["tok_emb"].shape[1]
    Ep = _round_up(E, LANE)
    F = params["layers"][0]["w1"].shape[1]
    Fp = _round_up(F, LANE)

    def pad2(a, r, c):
        return jnp.pad(a, ((0, r - a.shape[0]), (0, c - a.shape[1])))

    def padv(v, c):
        return jnp.pad(v, (0, c - v.shape[0]))

    wqkv, wo, w1, w2, vec = [], [], [], [], []
    for p in params["layers"]:
        wqkv.append(jnp.concatenate(
            [pad2(p["wq"], Ep, Ep), pad2(p["wk"], Ep, Ep), pad2(p["wv"], Ep, Ep)],
            axis=1).astype(jnp.bfloat16))
        wo.append(pad2(p["wo"], Ep, Ep).astype(jnp.bfloat16))
        w1.append(pad2(p["w1"], Ep, Fp).astype(jnp.bfloat16))
        w2.append(pad2(p["w2"], Fp, Ep).astype(jnp.bfloat16))
        v = jnp.concatenate([
            padv(p["bq"], Ep), padv(p["bk"], Ep), padv(p["bv"], Ep),
            padv(p["bo"], Ep), padv(p["ln1g"], Ep), padv(p["ln1b"], Ep),
            padv(p["b1"], Fp), padv(p["b2"], Ep),
            padv(p["ln2g"], Ep), padv(p["ln2b"], Ep)]).astype(jnp.float32)
        vec.append(v[None, :])
    return {
        "wqkv": jnp.stack(wqkv, axis=0),
        "wo": jnp.stack(wo, axis=0),
        "w1": jnp.stack(w1, axis=0),
        "w2": jnp.stack(w2, axis=0),
        "vec": jnp.stack(vec, axis=0),
    }


# ------------------------------ model glue -----------------------------------

def init_bert_params(key, *, n_items, max_len, embed_size, num_head, n_layers):
    del num_head  # layout is head-agnostic now
    vocab_size = n_items + 2
    E, ffn = embed_size, embed_size * 4
    keys = jax.random.split(key, 2 + n_layers)
    params = {
        "tok_emb": 0.02 * jax.random.normal(keys[0], (vocab_size, E), jnp.float32),
        "pos_emb": 0.02 * jax.random.normal(keys[1], (max_len, E), jnp.float32),
        "layers": [],
    }
    for l in range(n_layers):
        lk = jax.random.split(keys[2 + l], 16)
        params["layers"].append({
            "wq": 0.02 * jax.random.normal(lk[0], (E, E), jnp.float32),
            "bq": 0.02 * jax.random.normal(lk[1], (E,), jnp.float32),
            "wk": 0.02 * jax.random.normal(lk[2], (E, E), jnp.float32),
            "bk": 0.02 * jax.random.normal(lk[3], (E,), jnp.float32),
            "wv": 0.02 * jax.random.normal(lk[4], (E, E), jnp.float32),
            "bv": 0.02 * jax.random.normal(lk[5], (E,), jnp.float32),
            "wo": 0.02 * jax.random.normal(lk[6], (E, E), jnp.float32),
            "bo": 0.02 * jax.random.normal(lk[7], (E,), jnp.float32),
            "ln1g": 1.0 + 0.05 * jax.random.normal(lk[8], (E,), jnp.float32),
            "ln1b": 0.02 * jax.random.normal(lk[9], (E,), jnp.float32),
            "w1": 0.02 * jax.random.normal(lk[10], (E, ffn), jnp.float32),
            "b1": 0.02 * jax.random.normal(lk[11], (ffn,), jnp.float32),
            "w2": 0.02 * jax.random.normal(lk[12], (ffn, E), jnp.float32),
            "b2": 0.02 * jax.random.normal(lk[13], (E,), jnp.float32),
            "ln2g": 1.0 + 0.05 * jax.random.normal(lk[14], (E,), jnp.float32),
            "ln2b": 0.02 * jax.random.normal(lk[15], (E,), jnp.float32),
        })
    return params


def bert_forward(params, packed, x_ids, *, num_head):
    """x_ids: (B, S) int32 item ids -> (B, S, E) float32."""
    B, S = x_ids.shape
    E = params["tok_emb"].shape[1]
    Ep = packed["wo"].shape[-1]
    # Embedding: token lookup + learned positional embedding (gather stays in
    # plain JAX); dropout = identity at inference.
    x = params["tok_emb"][x_ids] + params["pos_emb"][None, :S, :]
    xp = jnp.pad(x.astype(jnp.float32), ((0, 0), (0, 0), (0, Ep - E)))
    xr = xp.reshape(B * S, Ep)                                  # fold (B, S) rows
    out = transformer_stack(xr, packed, num_head=num_head, valid_e=E, batch=B, seq=S)
    return out.reshape(B, S, Ep)[:, :, :E]


# --------------------------- pure-JAX reference ------------------------------

def _ln_ref(x, g, b, eps=LN_EPS):
    mu = jnp.mean(x, axis=-1, keepdims=True)
    var = jnp.mean((x - mu) ** 2, axis=-1, keepdims=True)
    return (x - mu) * jax.lax.rsqrt(var + eps) * g + b


def bert_reference(params, x_ids, *, num_head):
    E = params["tok_emb"].shape[1]
    dh = E // num_head
    B, S = x_ids.shape
    x = params["tok_emb"][x_ids] + params["pos_emb"][None, :S, :]
    for p in params["layers"]:
        q = x @ p["wq"] + p["bq"]
        k = x @ p["wk"] + p["bk"]
        v = x @ p["wv"] + p["bv"]
        def split(t):
            return t.reshape(B, S, num_head, dh).transpose(0, 2, 1, 3)
        qh, kh, vh = split(q), split(k), split(v)
        s = jnp.einsum('bhqd,bhkd->bhqk', qh, kh) / (dh ** 0.5)
        a = jax.nn.softmax(s, axis=-1)
        ctx = jnp.einsum('bhqk,bhkd->bhqd', a, vh).transpose(0, 2, 1, 3).reshape(B, S, E)
        x = _ln_ref(x + ctx @ p["wo"] + p["bo"], p["ln1g"], p["ln1b"])
        h1 = _gelu(x @ p["w1"] + p["b1"])
        x = _ln_ref(x + h1 @ p["w2"] + p["b2"], p["ln2g"], p["ln2b"])
    return x


# --------------------------------- main --------------------------------------

if __name__ == "__main__":
    max_len = 16
    n_layers = 2
    num_head = 2
    n_items = 50
    embed_size = 32
    batch = 2
    seq_len = 8

    key = jax.random.PRNGKey(0)
    pkey, xkey = jax.random.split(key)
    params = init_bert_params(
        pkey, n_items=n_items, max_len=max_len,
        embed_size=embed_size, num_head=num_head, n_layers=n_layers)
    packed = pack_params(params)

    x_ids = jax.random.randint(xkey, (batch, seq_len), 0, n_items + 2, dtype=jnp.int32)

    out = bert_forward(params, packed, x_ids, num_head=num_head)
    out = jax.block_until_ready(out)
    assert out.shape == (batch, seq_len, embed_size)

    ref = bert_reference(params, x_ids, num_head=num_head)
    err = float(jnp.max(jnp.abs(out - ref)))
    assert err < 0.1, f"kernel vs reference mismatch: {err}"

    print("KERNEL_OK")
</pallas_src>

<mosaic_0001>
module attributes {stable_mosaic.version = 11 : i64} {
  func.func @bert_stack_kernel(%arg0: i32, %arg1: i32, %arg2: memref<16x128xf32, #tpu.memory_space<any>>, %arg3: memref<1x128x384xbf16, #tpu.memory_space<vmem>>, %arg4: memref<1x128x128xbf16, #tpu.memory_space<vmem>>, %arg5: memref<1x128x128xbf16, #tpu.memory_space<vmem>>, %arg6: memref<1x128x128xbf16, #tpu.memory_space<vmem>>, %arg7: memref<1x1x1280xf32, #tpu.memory_space<vmem>>, %arg8: memref<8x128xf32, #tpu.memory_space<vmem>>, %arg9: memref<8x128xf32, #tpu.memory_space<vmem>>, %arg10: memref<1x!tpu.dma_semaphore, #tpu.memory_space<semaphore_mem>>) attributes {dimension_semantics = [#tpu.dimension_semantics<parallel>, #tpu.dimension_semantics<arbitrary>], iteration_bounds = array<i64: 2, 2>, scalar_prefetch = 0 : i64, scratch_operands = 2 : i64, tpu.core_type = #tpu.core_type<tc>, window_params = [{}, {transform_indices = @transform_1, window_bounds = array<i64: 1, 128, 384>}, {transform_indices = @transform_2, window_bounds = array<i64: 1, 128, 128>}, {transform_indices = @transform_3, window_bounds = array<i64: 1, 128, 128>}, {transform_indices = @transform_4, window_bounds = array<i64: 1, 128, 128>}, {transform_indices = @transform_5, window_bounds = array<i64: 1, 1, 1280>}, {transform_indices = @transform_6, window_bounds = array<i64: 8, 128>}]} {
    %c0_i32 = arith.constant 0 : i32
    %0 = arith.cmpi eq, %arg1, %c0_i32 : i32
    %1 = arith.extui %0 : i1 to i32
    %c0_i32_0 = arith.constant 0 : i32
    %2 = arith.cmpi ne, %1, %c0_i32_0 : i32
    scf.if %2 {
      %c8_i32 = arith.constant 8 : i32
      %159 = arith.muli %arg0, %c8_i32 : i32
      %160 = tpu.assume_multiple %159, 8 : i32
      %c0_i32_67 = arith.constant 0 : i32
      %c0_i32_68 = arith.constant 0 : i32
      %161 = tpu.memref_slice %arg2[%160, %c0_i32_68] : memref<16x128xf32, #tpu.memory_space<any>> -> memref<8x128xf32, #tpu.memory_space<any>>
      %162 = tpu.memref_slice %arg10[%c0_i32_67] : memref<1x!tpu.dma_semaphore, #tpu.memory_space<semaphore_mem>> -> memref<1x!tpu.dma_semaphore, #tpu.memory_space<semaphore_mem>>
      %163 = tpu.memref_squeeze %162 : memref<1x!tpu.dma_semaphore, #tpu.memory_space<semaphore_mem>> -> memref<!tpu.dma_semaphore, #tpu.memory_space<semaphore_mem>>
      tpu.enqueue_dma source(%161 : memref<8x128xf32, #tpu.memory_space<any>>) target(%arg8 : memref<8x128xf32, #tpu.memory_space<vmem>>) target_semaphore(%163 : memref<!tpu.dma_semaphore, #tpu.memory_space<semaphore_mem>>)
      %c0_i32_69 = arith.constant 0 : i32
      %c0_i32_70 = arith.constant 0 : i32
      %164 = tpu.memref_slice %arg2[%160, %c0_i32_70] : memref<16x128xf32, #tpu.memory_space<any>> -> memref<8x128xf32, #tpu.memory_space<any>>
      %165 = tpu.memref_slice %arg10[%c0_i32_69] : memref<1x!tpu.dma_semaphore, #tpu.memory_space<semaphore_mem>> -> memref<1x!tpu.dma_semaphore, #tpu.memory_space<semaphore_mem>>
      %166 = tpu.memref_squeeze %165 : memref<1x!tpu.dma_semaphore, #tpu.memory_space<semaphore_mem>> -> memref<!tpu.dma_semaphore, #tpu.memory_space<semaphore_mem>>
      tpu.wait_dma2 semaphore(%166 : memref<!tpu.dma_semaphore, #tpu.memory_space<semaphore_mem>>) src(%164 : memref<8x128xf32, #tpu.memory_space<any>>) dst(%arg8 : memref<8x128xf32, #tpu.memory_space<vmem>>)
      %cst_71 = arith.constant 0.000000e+00 : f32
      %167 = vector.broadcast %cst_71 : f32 to vector<8x128xf32>
      %c0_72 = arith.constant 0 : index
      %c0_73 = arith.constant 0 : index
      %168 = vector.load %arg9[%c0_72, %c0_73] : memref<8x128xf32, #tpu.memory_space<vmem>>, vector<8x128xf32>
      tpu.vector_store %arg9[%c0_72, %c0_73], %167 {strides = array<i32>} : memref<8x128xf32, #tpu.memory_space<vmem>>, vector<8x128xf32>,
    } else {
    }
    %c0 = arith.constant 0 : index
    %c0_1 = arith.constant 0 : index
    %3 = vector.load %arg8[%c0, %c0_1] : memref<8x128xf32, #tpu.memory_space<vmem>>, vector<8x128xf32>
    %4 = tpu.iota {dimensions = array<i32: 1>} : vector<1x128xi32>
    %c32_i32 = arith.constant 32 : i32
    %5 = vector.broadcast %c32_i32 : i32 to vector<1x128xi32>
    %6 = arith.cmpi slt, %4, %5 : vector<1x128xi32>
    %c0_2 = arith.constant 0 : index
    %c0_3 = arith.constant 0 : index
    %c0_4 = arith.constant 0 : index
    %7 = vector.load %arg7[%c0_2, %c0_3, %c0_4] : memref<1x1x1280xf32, #tpu.memory_space<vmem>>, vector<1x1x384xf32>
    %8 = vector.shape_cast %7 : vector<1x1x384xf32> to vector<1x384xf32>
    %c0_5 = arith.constant 0 : index
    %c0_6 = arith.constant 0 : index
    %c384 = arith.constant 384 : index
    %9 = vector.load %arg7[%c0_5, %c0_6, %c384] : memref<1x1x1280xf32, #tpu.memory_space<vmem>>, vector<1x1x128xf32>
    %10 = vector.shape_cast %9 : vector<1x1x128xf32> to vector<1x128xf32>
    %c0_7 = arith.constant 0 : index
    %c0_8 = arith.constant 0 : index
    %c512 = arith.constant 512 : index
    %11 = vector.load %arg7[%c0_7, %c0_8, %c512] : memref<1x1x1280xf32, #tpu.memory_space<vmem>>, vector<1x1x128xf32>
    %12 = vector.shape_cast %11 : vector<1x1x128xf32> to vector<1x128xf32>
    %c0_9 = arith.constant 0 : index
    %c0_10 = arith.constant 0 : index
    %c640 = arith.constant 640 : index
    %13 = vector.load %arg7[%c0_9, %c0_10, %c640] : memref<1x1x1280xf32, #tpu.memory_space<vmem>>, vector<1x1x128xf32>
    %14 = vector.shape_cast %13 : vector<1x1x128xf32> to vector<1x128xf32>
    %c0_11 = arith.constant 0 : index
    %c0_12 = arith.constant 0 : index
    %c768 = arith.constant 768 : index
    %15 = vector.load %arg7[%c0_11, %c0_12, %c768] : memref<1x1x1280xf32, #tpu.memory_space<vmem>>, vector<1x1x128xf32>
    %16 = vector.shape_cast %15 : vector<1x1x128xf32> to vector<1x128xf32>
    %c0_13 = arith.constant 0 : index
    %c0_14 = arith.constant 0 : index
    %c896 = arith.constant 896 : index
    %17 = vector.load %arg7[%c0_13, %c0_14, %c896] : memref<1x1x1280xf32, #tpu.memory_space<vmem>>, vector<1x1x128xf32>
    %18 = vector.shape_cast %17 : vector<1x1x128xf32> to vector<1x128xf32>
    %c0_15 = arith.constant 0 : index
    %c0_16 = arith.constant 0 : index
    %c1024 = arith.constant 1024 : index
    %19 = vector.load %arg7[%c0_15, %c0_16, %c1024] : memref<1x1x1280xf32, #tpu.memory_space<vmem>>, vector<1x1x128xf32>
    %20 = vector.shape_cast %19 : vector<1x1x128xf32> to vector<1x128xf32>
    %c0_17 = arith.constant 0 : index
    %c0_18 = arith.constant 0 : index
    %c1152 = arith.constant 1152 : index
    %21 = vector.load %arg7[%c0_17, %c0_18, %c1152] : memref<1x1x1280xf32, #tpu.memory_space<vmem>>, vector<1x1x128xf32>
    %22 = vector.shape_cast %21 : vector<1x1x128xf32> to vector<1x128xf32>
    %23 = arith.truncf %3 : vector<8x128xf32> to vector<8x128xbf16>
    %c0_19 = arith.constant 0 : index
    %c0_20 = arith.constant 0 : index
    %c0_21 = arith.constant 0 : index
    %24 = vector.load %arg3[%c0_19, %c0_20, %c0_21] : memref<1x128x384xbf16, #tpu.memory_space<vmem>>, vector<1x128x384xbf16>
    %25 = vector.shape_cast %24 : vector<1x128x384xbf16> to vector<128x384xbf16>
    %cst = arith.constant dense<0.000000e+00> : vector<8x384xf32>
    %26 = tpu.matmul %23, %25, %cst {dimension_numbers = #tpu.dot_dimension_numbers<[1], [0], [0], [1], [0, 0, 1, 1], [], []>} : vector<8x128xbf16>, vector<128x384xbf16>, vector<8x384xf32> -> vector<8x384xf32>
    %27 = vector.broadcast %8 : vector<1x384xf32> to vector<8x384xf32>
    %28 = arith.addf %26, %27 : vector<8x384xf32>
    %29 = vector.shape_cast %28 : vector<8x384xf32> to vector<1x8x384xf32>
    %30 = vector.extract_strided_slice %29 {offsets = [0, 0, 0], sizes = [1, 8, 16], strides = [1, 1, 1]} : vector<1x8x384xf32> to vector<1x8x16xf32>
    %31 = arith.truncf %30 : vector<1x8x16xf32> to vector<1x8x16xbf16>
    %32 = vector.extract_strided_slice %29 {offsets = [0, 0, 128], sizes = [1, 8, 16], strides = [1, 1, 1]} : vector<1x8x384xf32> to vector<1x8x16xf32>
    %33 = arith.truncf %32 : vector<1x8x16xf32> to vector<1x8x16xbf16>
    %34 = vector.extract_strided_slice %29 {offsets = [0, 0, 256], sizes = [1, 8, 16], strides = [1, 1, 1]} : vector<1x8x384xf32> to vector<1x8x16xf32>
    %35 = arith.truncf %34 : vector<1x8x16xf32> to vector<1x8x16xbf16>
    "tpu.trace_start"() <{level = 10 : i32, message = "bqd,bkd->bqk"}> : () -> ()
    %cst_22 = arith.constant dense<0.000000e+00> : vector<1x8x8xf32>
    %36 = tpu.matmul %31, %33, %cst_22 {dimension_numbers = #tpu.dot_dimension_numbers<[2], [2], [1], [1], [0, 0, 0, 1, 1, 1], [0], [0]>} : vector<1x8x16xbf16>, vector<1x8x16xbf16>, vector<1x8x8xf32> -> vector<1x8x8xf32>
    "tpu.trace_stop"() : () -> ()
    %cst_23 = arith.constant 2.500000e-01 : f32
    %37 = vector.broadcast %cst_23 : f32 to vector<1x8x8xf32>
    %38 = arith.mulf %36, %37 : vector<1x8x8xf32>
    %cst_24 = arith.constant dense<0xFF800000> : vector<1x8xf32>
    %39 = vector.multi_reduction <maximumf>, %38, %cst_24 [2] : vector<1x8x8xf32> to vector<1x8xf32>
    %40 = vector.shape_cast %39 : vector<1x8xf32> to vector<1x8x1xf32>
    %41 = vector.broadcast %40 : vector<1x8x1xf32> to vector<1x8x8xf32>
    %42 = arith.subf %38, %41 : vector<1x8x8xf32>
    %43 = math.exp %42 : vector<1x8x8xf32>
    %cst_25 = arith.constant dense<0.000000e+00> : vector<1x8xf32>
    %44 = vector.multi_reduction <add>, %43, %cst_25 [2] : vector<1x8x8xf32> to vector<1x8xf32>
    %45 = vector.shape_cast %44 : vector<1x8xf32> to vector<1x8x1xf32>
    %46 = tpu.reciprocal %45 {approx = true} : vector<1x8x1xf32> -> vector<1x8x1xf32>
    %47 = vector.broadcast %46 : vector<1x8x1xf32> to vector<1x8x8xf32>
    %48 = arith.mulf %43, %47 : vector<1x8x8xf32>
    %49 = arith.truncf %48 : vector<1x8x8xf32> to vector<1x8x8xbf16>
    "tpu.trace_start"() <{level = 10 : i32, message = "bqk,bkd->bqd"}> : () -> ()
    %cst_26 = arith.constant dense<0.000000e+00> : vector<1x8x16xf32>
    %50 = tpu.matmul %49, %35, %cst_26 {dimension_numbers = #tpu.dot_dimension_numbers<[2], [1], [1], [2], [0, 0, 0, 1, 1, 2], [0], [0]>} : vector<1x8x8xbf16>, vector<1x8x16xbf16>, vector<1x8x16xf32> -> vector<1x8x16xf32>
    "tpu.trace_stop"() : () -> ()
    %51 = vector.shape_cast %50 : vector<1x8x16xf32> to vector<8x16xf32>
    %c0_27 = arith.constant 0 : index
    %c0_28 = arith.constant 0 : index
    %52 = vector.load %arg9[%c0_27, %c0_28] : memref<8x128xf32, #tpu.memory_space<vmem>>, vector<8x16xf32>
    tpu.vector_store %arg9[%c0_27, %c0_28], %51 {strides = array<i32>} : memref<8x128xf32, #tpu.memory_space<vmem>>, vector<8x16xf32>,
    %53 = vector.extract_strided_slice %29 {offsets = [0, 0, 16], sizes = [1, 8, 16], strides = [1, 1, 1]} : vector<1x8x384xf32> to vector<1x8x16xf32>
    %54 = arith.truncf %53 : vector<1x8x16xf32> to vector<1x8x16xbf16>
    %55 = vector.extract_strided_slice %29 {offsets = [0, 0, 144], sizes = [1, 8, 16], strides = [1, 1, 1]} : vector<1x8x384xf32> to vector<1x8x16xf32>
    %56 = arith.truncf %55 : vector<1x8x16xf32> to vector<1x8x16xbf16>
    %57 = vector.extract_strided_slice %29 {offsets = [0, 0, 272], sizes = [1, 8, 16], strides = [1, 1, 1]} : vector<1x8x384xf32> to vector<1x8x16xf32>
    %58 = arith.truncf %57 : vector<1x8x16xf32> to vector<1x8x16xbf16>
    "tpu.trace_start"() <{level = 10 : i32, message = "bqd,bkd->bqk"}> : () -> ()
    %cst_29 = arith.constant dense<0.000000e+00> : vector<1x8x8xf32>
    %59 = tpu.matmul %54, %56, %cst_29 {dimension_numbers = #tpu.dot_dimension_numbers<[2], [2], [1], [1], [0, 0, 0, 1, 1, 1], [0], [0]>} : vector<1x8x16xbf16>, vector<1x8x16xbf16>, vector<1x8x8xf32> -> vector<1x8x8xf32>
    "tpu.trace_stop"() : () -> ()
    %cst_30 = arith.constant 2.500000e-01 : f32
    %60 = vector.broadcast %cst_30 : f32 to vector<1x8x8xf32>
    %61 = arith.mulf %59, %60 : vector<1x8x8xf32>
    %cst_31 = arith.constant dense<0xFF800000> : vector<1x8xf32>
    %62 = vector.multi_reduction <maximumf>, %61, %cst_31 [2] : vector<1x8x8xf32> to vector<1x8xf32>
    %63 = vector.shape_cast %62 : vector<1x8xf32> to vector<1x8x1xf32>
    %64 = vector.broadcast %63 : vector<1x8x1xf32> to vector<1x8x8xf32>
    %65 = arith.subf %61, %64 : vector<1x8x8xf32>
    %66 = math.exp %65 : vector<1x8x8xf32>
    %cst_32 = arith.constant dense<0.000000e+00> : vector<1x8xf32>
    %67 = vector.multi_reduction <add>, %66, %cst_32 [2] : vector<1x8x8xf32> to vector<1x8xf32>
    %68 = vector.shape_cast %67 : vector<1x8xf32> to vector<1x8x1xf32>
    %69 = tpu.reciprocal %68 {approx = true} : vector<1x8x1xf32> -> vector<1x8x1xf32>
    %70 = vector.broadcast %69 : vector<1x8x1xf32> to vector<1x8x8xf32>
    %71 = arith.mulf %66, %70 : vector<1x8x8xf32>
    %72 = arith.truncf %71 : vector<1x8x8xf32> to vector<1x8x8xbf16>
    "tpu.trace_start"() <{level = 10 : i32, message = "bqk,bkd->bqd"}> : () -> ()
    %cst_33 = arith.constant dense<0.000000e+00> : vector<1x8x16xf32>
    %73 = tpu.matmul %72, %58, %cst_33 {dimension_numbers = #tpu.dot_dimension_numbers<[2], [1], [1], [2], [0, 0, 0, 1, 1, 2], [0], [0]>} : vector<1x8x8xbf16>, vector<1x8x16xbf16>, vector<1x8x16xf32> -> vector<1x8x16xf32>
    "tpu.trace_stop"() : () -> ()
    %74 = vector.shape_cast %73 : vector<1x8x16xf32> to vector<8x16xf32>
    %c0_34 = arith.constant 0 : index
    %c16 = arith.constant 16 : index
    %75 = vector.load %arg9[%c0_34, %c16] : memref<8x128xf32, #tpu.memory_space<vmem>>, vector<8x16xf32>
    tpu.vector_store %arg9[%c0_34, %c16], %74 {strides = array<i32>} : memref<8x128xf32, #tpu.memory_space<vmem>>, vector<8x16xf32>,
    %c0_35 = arith.constant 0 : index
    %c0_36 = arith.constant 0 : index
    %76 = vector.load %arg9[%c0_35, %c0_36] : memref<8x128xf32, #tpu.memory_space<vmem>>, vector<8x128xf32>
    %77 = arith.truncf %76 : vector<8x128xf32> to vector<8x128xbf16>
    %c0_37 = arith.constant 0 : index
    %c0_38 = arith.constant 0 : index
    %c0_39 = arith.constant 0 : index
    %78 = vector.load %arg4[%c0_37, %c0_38, %c0_39] : memref<1x128x128xbf16, #tpu.memory_space<vmem>>, vector<1x128x128xbf16>
    %79 = vector.shape_cast %78 : vector<1x128x128xbf16> to vector<128x128xbf16>
    %cst_40 = arith.constant dense<0.000000e+00> : vector<8x128xf32>
    %80 = tpu.matmul %77, %79, %cst_40 {dimension_numbers = #tpu.dot_dimension_numbers<[1], [0], [0], [1], [0, 0, 1, 1], [], []>} : vector<8x128xbf16>, vector<128x128xbf16>, vector<8x128xf32> -> vector<8x128xf32>
    %81 = vector.broadcast %10 : vector<1x128xf32> to vector<8x128xf32>
    %82 = arith.addf %80, %81 : vector<8x128xf32>
    %83 = arith.addf %3, %82 : vector<8x128xf32>
    %cst_41 = arith.constant dense<0.000000e+00> : vector<8xf32>
    %84 = vector.multi_reduction <add>, %83, %cst_41 [1] : vector<8x128xf32> to vector<8xf32>
    %85 = vector.shape_cast %84 : vector<8xf32> to vector<8x1xf32>
    %cst_42 = arith.constant 3.125000e-02 : f32
    %86 = vector.broadcast %cst_42 : f32 to vector<8x1xf32>
    %87 = arith.mulf %85, %86 : vector<8x1xf32>
    %88 = vector.broadcast %87 : vector<8x1xf32> to vector<8x128xf32>
    %89 = arith.subf %83, %88 : vector<8x128xf32>
    %cst_43 = arith.constant 0.000000e+00 : f32
    %90 = vector.shape_cast %6 : vector<1x128xi1> to vector<1x128xi1>
    %91 = vector.broadcast %90 : vector<1x128xi1> to vector<8x128xi1>
    %92 = vector.broadcast %cst_43 : f32 to vector<8x128xf32>
    %93 = arith.select %91, %89, %92 : vector<8x128xi1>, vector<8x128xf32>
    %94 = arith.mulf %93, %93 : vector<8x128xf32>
    %cst_44 = arith.constant dense<0.000000e+00> : vector<8xf32>
    %95 = vector.multi_reduction <add>, %94, %cst_44 [1] : vector<8x128xf32> to vector<8xf32>
    %96 = vector.shape_cast %95 : vector<8xf32> to vector<8x1xf32>
    %cst_45 = arith.constant 3.125000e-02 : f32
    %97 = vector.broadcast %cst_45 : f32 to vector<8x1xf32>
    %98 = arith.mulf %96, %97 : vector<8x1xf32>
    %cst_46 = arith.constant 9.99999997E-7 : f32
    %99 = vector.broadcast %cst_46 : f32 to vector<8x1xf32>
    %100 = arith.addf %98, %99 : vector<8x1xf32>
    %101 = math.rsqrt %100 : vector<8x1xf32>
    %102 = vector.broadcast %101 : vector<8x1xf32> to vector<8x128xf32>
    %103 = arith.mulf %89, %102 : vector<8x128xf32>
    %104 = vector.broadcast %12 : vector<1x128xf32> to vector<8x128xf32>
    %105 = arith.mulf %103, %104 : vector<8x128xf32>
    %106 = vector.broadcast %14 : vector<1x128xf32> to vector<8x128xf32>
    %107 = arith.addf %105, %106 : vector<8x128xf32>
    %108 = arith.truncf %107 : vector<8x128xf32> to vector<8x128xbf16>
    %c0_47 = arith.constant 0 : index
    %c0_48 = arith.constant 0 : index
    %c0_49 = arith.constant 0 : index
    %109 = vector.load %arg5[%c0_47, %c0_48, %c0_49] : memref<1x128x128xbf16, #tpu.memory_space<vmem>>, vector<1x128x128xbf16>
    %110 = vector.shape_cast %109 : vector<1x128x128xbf16> to vector<128x128xbf16>
    %cst_50 = arith.constant dense<0.000000e+00> : vector<8x128xf32>
    %111 = tpu.matmul %108, %110, %cst_50 {dimension_numbers = #tpu.dot_dimension_numbers<[1], [0], [0], [1], [0, 0, 1, 1], [], []>} : vector<8x128xbf16>, vector<128x128xbf16>, vector<8x128xf32> -> vector<8x128xf32>
    %112 = vector.broadcast %16 : vector<1x128xf32> to vector<8x128xf32>
    %113 = arith.addf %111, %112 : vector<8x128xf32>
    %cst_51 = arith.constant 5.000000e-01 : f32
    %114 = vector.broadcast %cst_51 : f32 to vector<8x128xf32>
    %115 = arith.mulf %114, %113 : vector<8x128xf32>
    %cst_52 = arith.constant 4.471500e-02 : f32
    %116 = vector.broadcast %cst_52 : f32 to vector<8x128xf32>
    %117 = arith.mulf %116, %113 : vector<8x128xf32>
    %118 = arith.mulf %117, %113 : vector<8x128xf32>
    %119 = arith.mulf %118, %113 : vector<8x128xf32>
    %120 = arith.addf %113, %119 : vector<8x128xf32>
    %cst_53 = arith.constant 0.797884583 : f32
    %121 = vector.broadcast %cst_53 : f32 to vector<8x128xf32>
    %122 = arith.mulf %121, %120 : vector<8x128xf32>
    %123 = math.tanh %122 : vector<8x128xf32>
    %cst_54 = arith.constant 1.000000e+00 : f32
    %124 = vector.broadcast %cst_54 : f32 to vector<8x128xf32>
    %125 = arith.addf %124, %123 : vector<8x128xf32>
    %126 = arith.mulf %115, %125 : vector<8x128xf32>
    %127 = arith.truncf %126 : vector<8x128xf32> to vector<8x128xbf16>
    %c0_55 = arith.constant 0 : index
    %c0_56 = arith.constant 0 : index
    %c0_57 = arith.constant 0 : index
    %128 = vector.load %arg6[%c0_55, %c0_56, %c0_57] : memref<1x128x128xbf16, #tpu.memory_space<vmem>>, vector<1x128x128xbf16>
    %129 = vector.shape_cast %128 : vector<1x128x128xbf16> to vector<128x128xbf16>
    %cst_58 = arith.constant dense<0.000000e+00> : vector<8x128xf32>
    %130 = tpu.matmul %127, %129, %cst_58 {dimension_numbers = #tpu.dot_dimension_numbers<[1], [0], [0], [1], [0, 0, 1, 1], [], []>} : vector<8x128xbf16>, vector<128x128xbf16>, vector<8x128xf32> -> vector<8x128xf32>
    %131 = vector.broadcast %18 : vector<1x128xf32> to vector<8x128xf32>
    %132 = arith.addf %130, %131 : vector<8x128xf32>
    %133 = arith.addf %107, %132 : vector<8x128xf32>
    %cst_59 = arith.constant dense<0.000000e+00> : vector<8xf32>
    %134 = vector.multi_reduction <add>, %133, %cst_59 [1] : vector<8x128xf32> to vector<8xf32>
    %135 = vector.shape_cast %134 : vector<8xf32> to vector<8x1xf32>
    %cst_60 = arith.constant 3.125000e-02 : f32
    %136 = vector.broadcast %cst_60 : f32 to vector<8x1xf32>
    %137 = arith.mulf %135, %136 : vector<8x1xf32>
    %138 = vector.broadcast %137 : vector<8x1xf32> to vector<8x128xf32>
    %139 = arith.subf %133, %138 : vector<8x128xf32>
    %cst_61 = arith.constant 0.000000e+00 : f32
    %140 = vector.shape_cast %6 : vector<1x128xi1> to vector<1x128xi1>
    %141 = vector.broadcast %140 : vector<1x128xi1> to vector<8x128xi1>
    %142 = vector.broadcast %cst_61 : f32 to vector<8x128xf32>
    %143 = arith.select %141, %139, %142 : vector<8x128xi1>, vector<8x128xf32>
    %144 = arith.mulf %143, %143 : vector<8x128xf32>
    %cst_62 = arith.constant dense<0.000000e+00> : vector<8xf32>
    %145 = vector.multi_reduction <add>, %144, %cst_62 [1] : vector<8x128xf32> to vector<8xf32>
    %146 = vector.shape_cast %145 : vector<8xf32> to vector<8x1xf32>
    %cst_63 = arith.constant 3.125000e-02 : f32
    %147 = vector.broadcast %cst_63 : f32 to vector<8x1xf32>
    %148 = arith.mulf %146, %147 : vector<8x1xf32>
    %cst_64 = arith.constant 9.99999997E-7 : f32
    %149 = vector.broadcast %cst_64 : f32 to vector<8x1xf32>
    %150 = arith.addf %148, %149 : vector<8x1xf32>
    %151 = math.rsqrt %150 : vector<8x1xf32>
    %152 = vector.broadcast %151 : vector<8x1xf32> to vector<8x128xf32>
    %153 = arith.mulf %139, %152 : vector<8x128xf32>
    %154 = vector.broadcast %20 : vector<1x128xf32> to vector<8x128xf32>
    %155 = arith.mulf %153, %154 : vector<8x128xf32>
    %156 = vector.broadcast %22 : vector<1x128xf32> to vector<8x128xf32>
    %157 = arith.addf %155, %156 : vector<8x128xf32>
    %c0_65 = arith.constant 0 : index
    %c0_66 = arith.constant 0 : index
    %158 = vector.load %arg8[%c0_65, %c0_66] : memref<8x128xf32, #tpu.memory_space<vmem>>, vector<8x128xf32>
    tpu.vector_store %arg8[%c0_65, %c0_66], %157 {strides = array<i32>} : memref<8x128xf32, #tpu.memory_space<vmem>>, vector<8x128xf32>,
    return
  }
  func.func @transform_1(%arg0: i32, %arg1: i32) -> (i32, i32, i32) {
    %c0_i32 = arith.constant 0 : i32
    %c0_i32_0 = arith.constant 0 : i32
    %c0_i32_1 = arith.constant 0 : i32
    return %arg1, %c0_i32, %c0_i32_0 : i32, i32, i32
  }
  func.func @transform_2(%arg0: i32, %arg1: i32) -> (i32, i32, i32) {
    %c0_i32 = arith.constant 0 : i32
    %c0_i32_0 = arith.constant 0 : i32
    %c0_i32_1 = arith.constant 0 : i32
    return %arg1, %c0_i32, %c0_i32_0 : i32, i32, i32
  }
  func.func @transform_3(%arg0: i32, %arg1: i32) -> (i32, i32, i32) {
    %c0_i32 = arith.constant 0 : i32
    %c0_i32_0 = arith.constant 0 : i32
    %c0_i32_1 = arith.constant 0 : i32
    return %arg1, %c0_i32, %c0_i32_0 : i32, i32, i32
  }
  func.func @transform_4(%arg0: i32, %arg1: i32) -> (i32, i32, i32) {
    %c0_i32 = arith.constant 0 : i32
    %c0_i32_0 = arith.constant 0 : i32
    %c0_i32_1 = arith.constant 0 : i32
    return %arg1, %c0_i32, %c0_i32_0 : i32, i32, i32
  }
  func.func @transform_5(%arg0: i32, %arg1: i32) -> (i32, i32, i32) {
    %c0_i32 = arith.constant 0 : i32
    %c0_i32_0 = arith.constant 0 : i32
    %c0_i32_1 = arith.constant 0 : i32
    return %arg1, %c0_i32, %c0_i32_0 : i32, i32, i32
  }
  func.func @transform_6(%arg0: i32, %arg1: i32) -> (i32, i32) {
    %c0_i32 = arith.constant 0 : i32
    %c0_i32_0 = arith.constant 0 : i32
    return %arg0, %c0_i32 : i32, i32
  }
}

</mosaic_0001>

<llo_original>
// kernel: tpu_custom_call.1
$region0: #{tpu_custom_call.1}
  #allocation0 [shape = 'u32[]', space=smem, size = 0x4, offset = 0x4, fixed_abs, tag = 'smem constant byte address 0x4 - core index']
  #allocation1 [shape = 'u32[72,128]{1,0:T(1,128)}', space=vmem, size = 0x9000, scoped, tag = 'internal scratch']
  #allocation2 [shape = 'f32[8,128]{1,0:T(8,128)}', space=vmem, size = 0x1000, scoped, tag = 'scratch operand']
  #allocation3 [shape = 's32[1]{0}', space=sflag, size = 0x4, scoped, tag = 'scratch operand']
  #allocation14 [shape = 's32[]', space=sflag, size = 0x4, offset = 0, fixed_abs, tag = 'sflag constant byte address 0x0 - dummy sync flag']
  #allocation15 [shape = 's32[]', space=sflag, size = 0x4, offset = 0, fixed_abs, tag = 'sflag constant byte address 0x0 - dummy sync flag']
  #allocation16 [shape = 'u32[]', space=smem, size = 0x4, offset = 0x44, fixed_abs, tag = 'smem constant byte address 0x44 - assertion arg 0']
  #allocation17 [shape = 'u32[]', space=smem, size = 0x4, offset = 0x48, fixed_abs, tag = 'smem constant byte address 0x48 - assertion arg 1']
  %s0 = inlined_call_operand.hbm [shape: f32[16,128], index: 0, kind: input, shape index: {}]
  %s1 = inlined_call_operand.hbm [shape: bf16[2,128,384], index: 1, kind: input, shape index: {}]
  %s2 = inlined_call_operand.hbm [shape: bf16[2,128,128], index: 2, kind: input, shape index: {}]
  %s3 = inlined_call_operand.hbm [shape: bf16[2,128,128], index: 3, kind: input, shape index: {}]
  %s4 = inlined_call_operand.hbm [shape: bf16[2,128,128], index: 4, kind: input, shape index: {}]
  %s5 = inlined_call_operand.hbm [shape: f32[2,1,1280], index: 5, kind: input, shape index: {}]
  %s6 = inlined_call_operand.hbm [shape: f32[16,128], index: 6, kind: output, shape index: {}]
  %s7 = sld [smem:[#allocation0]]
  $region81: #{tpu_custom_call.1} parent=0
    _
  %s9 = ssub.s32 1, %s7
  %s10 = scalar_select 0, %s9, %s7
  $region1: #{tpu_custom_call.1} parent=0
    #allocation4 [shape = 'u8[196608]{0}', space=vmem, size = 0x30000, scoped, tag = 'input window, operand 1']
    #allocation5 [shape = 's32[2]{0}', space=sflag, size = 0x8, scoped, tag = 'scoped memory for tpu_custom_call.1']
    #allocation6 [shape = 's32[2]{0}', space=sflag, size = 0x8, scoped, tag = 'scoped memory for tpu_custom_call.1']
    #allocation7 [shape = 'u8[65536]{0}', space=vmem, size = 0x10000, scoped, tag = 'input window, operand 2']
    #allocation8 [shape = 's32[2]{0}', space=sflag, size = 0x8, scoped, tag = 'scoped memory for tpu_custom_call.1']
    #allocation9 [shape = 'u8[65536]{0}', space=vmem, size = 0x10000, scoped, tag = 'input window, operand 3']
    #allocation10 [shape = 'u8[65536]{0}', space=vmem, size = 0x10000, scoped, tag = 'input window, operand 4']
    #allocation11 [shape = 's32[2]{0}', space=sflag, size = 0x8, scoped, tag = 'scoped memory for tpu_custom_call.1']
    #allocation12 [shape = 'u8[10240]{0}', space=vmem, size = 0x2800, scoped, tag = 'input window, operand 5']
    #allocation13 [shape = 'u8[8192]{0}', space=vmem, size = 0x2000, scoped, tag = 'output window, operand 0']
    %11 = vsyncpa [#allocation5], 0
    %s12 = scalar_lea.sflag [#allocation5], 1
    %13 = vsyncpa %s12, 0
    %14 = vsyncpa [#allocation8], 0
    %s15 = scalar_lea.sflag [#allocation8], 1
    %16 = vsyncpa %s15, 0
    %17 = vsyncpa [#allocation11], 0
    %s18 = scalar_lea.sflag [#allocation11], 1
    %19 = vsyncpa %s18, 0
    %20 = vsyncpa [#allocation6], 0
    %s21 = scalar_lea.sflag [#allocation6], 1
    %22 = vsyncpa %s21, 0
    loop: start=0, step=1, limit=6
    $region2: #{tpu_custom_call.1} parent=1 // loop_pre_header
      _
    $region3: #{tpu_custom_call.1} parent=1 // loop_header
      %s24 = sphi 0, %s28
      %p25 = scmp.ge.s32.totalorder %s24, 6
      %s31 = sphi 0, %s43
      %s32 = sphi 0, %s39
      %s33 = sphi 0, %s31
      %s34 = sphi 0, %s32
      %s35 = sphi 0, %s33
      %s36 = sphi 0, %s34
      %s46 = sphi 0, %s48
      %s49 = sphi 0, %s46
      %s50 = sphi 0, %s49
      %s66 = sphi 0, %s50
      %s72 = sphi 0, %s74
      %s75 = sphi 0, %s72
      %s76 = sphi 0, %s75
      %s92 = sphi 0, %s76
      %s98 = sphi 0, %s100
      %s101 = sphi 0, %s98
      %s102 = sphi 0, %s101
      %s118 = sphi 0, %s102
      %s124 = sphi 0, %s126
      %s127 = sphi 0, %s124
      %s128 = sphi 0, %s127
      %s144 = sphi 0, %s128
      %s150 = sphi 0, %s152
      %s153 = sphi 0, %s150
      %s154 = sphi 0, %s153
      %s170 = sphi 0, %s154
      %s176 = sphi 0, %s178
      %s179 = sphi 0, %s176
      %s180 = sphi 0, %s179
      %s196 = sphi 0, %s180
    $region4: #{tpu_custom_call.1} parent=1 // loop_header_branch
      %27 = sbr.rel (%p25) target = $region8
    $region5: #{tpu_custom_call.1} parent=1 // loop_body
      %s29 = ssub.s32 %s24, 1
      %s30 = ssub.s32 %s24, 2
      %s37 = sadd.s32 1, %s32
      %p38 = scmp.ge.s32.totalorder %s37, 2
      %s39 = scalar_select %p38, 0, %s37
      %s40 = sadd.s32 1, %s31
      %s41 = scalar_select %p38, %s40, %s31
      %p42 = scmp.ge.s32.totalorder %s41, 2
      %s43 = scalar_select %p42, 0, %s41
      %s44 = ssub.s32 %s32, %s39
      %p45 = scmp.eq.s32.totalorder %s44, 0
      %s47 = sadd.s32 %s46, 1
      %s48 = scalar_select %p45, %s46, %s47
      %p51 = pneg %p45
      %p52 = scmp.eq.s32.totalorder %s24, 3
      %p53 = por %p51, %p52
      %p54 = scmp.ne.s32.totalorder %s46, %s49
      %p55 = scmp.eq.s32.totalorder %s24, 0
      %p56 = por %p54, %p55
      %p57 = scmp.ne.s32.totalorder %s46, %s49
      %p58 = scmp.eq.s32.totalorder %s29, 3
      %p59 = por %p57, %p58
      %p60 = scmp.ne.s32.totalorder %s49, %s50
      %p61 = scmp.eq.s32.totalorder %s29, 0
      %p62 = por %p60, %p61
      %p63 = scmp.ne.s32.totalorder %s49, %s50
      %p64 = scmp.eq.s32.totalorder %s30, 3
      %p65 = por %p63, %p64
      %p67 = scmp.ne.s32.totalorder %s50, %s66
      %p68 = scmp.eq.s32.totalorder %s30, 0
      %p69 = por %p67, %p68
      %s70 = ssub.s32 %s32, %s39
      %p71 = scmp.eq.s32.totalorder %s70, 0
      %s73 = sadd.s32 %s72, 1
      %s74 = scalar_select %p71, %s72, %s73
      %p77 = pneg %p71
      %p78 = scmp.eq.s32.totalorder %s24, 3
      %p79 = por %p77, %p78
      %p80 = scmp.ne.s32.totalorder %s72, %s75
      %p81 = scmp.eq.s32.totalorder %s24, 0
      %p82 = por %p80, %p81
      %p83 = scmp.ne.s32.totalorder %s72, %s75
      %p84 = scmp.eq.s32.totalorder %s29, 3
      %p85 = por %p83, %p84
      %p86 = scmp.ne.s32.totalorder %s75, %s76
      %p87 = scmp.eq.s32.totalorder %s29, 0
      %p88 = por %p86, %p87
      %p89 = scmp.ne.s32.totalorder %s75, %s76
      %p90 = scmp.eq.s32.totalorder %s30, 3
      %p91 = por %p89, %p90
      %p93 = scmp.ne.s32.totalorder %s76, %s92
      %p94 = scmp.eq.s32.totalorder %s30, 0
      %p95 = por %p93, %p94
      %s96 = ssub.s32 %s32, %s39
      %p97 = scmp.eq.s32.totalorder %s96, 0
      %s99 = sadd.s32 %s98, 1
      %s100 = scalar_select %p97, %s98, %s99
      %p103 = pneg %p97
      %p104 = scmp.eq.s32.totalorder %s24, 3
      %p105 = por %p103, %p104
      %p106 = scmp.ne.s32.totalorder %s98, %s101
      %p107 = scmp.eq.s32.totalorder %s24, 0
      %p108 = por %p106, %p107
      %p109 = scmp.ne.s32.totalorder %s98, %s101
      %p110 = scmp.eq.s32.totalorder %s29, 3
      %p111 = por %p109, %p110
      %p112 = scmp.ne.s32.totalorder %s101, %s102
      %p113 = scmp.eq.s32.totalorder %s29, 0
      %p114 = por %p112, %p113
      %p115 = scmp.ne.s32.totalorder %s101, %s102
      %p116 = scmp.eq.s32.totalorder %s30, 3
      %p117 = por %p115, %p116
      %p119 = scmp.ne.s32.totalorder %s102, %s118
      %p120 = scmp.eq.s32.totalorder %s30, 0
      %p121 = por %p119, %p120
      %s122 = ssub.s32 %s32, %s39
      %p123 = scmp.eq.s32.totalorder %s122, 0
      %s125 = sadd.s32 %s124, 1
      %s126 = scalar_select %p123, %s124, %s125
      %p129 = pneg %p123
      %p130 = scmp.eq.s32.totalorder %s24, 3
      %p131 = por %p129, %p130
      %p132 = scmp.ne.s32.totalorder %s124, %s127
      %p133 = scmp.eq.s32.totalorder %s24, 0
      %p134 = por %p132, %p133
      %p135 = scmp.ne.s32.totalorder %s124, %s127
      %p136 = scmp.eq.s32.totalorder %s29, 3
      %p137 = por %p135, %p136
      %p138 = scmp.ne.s32.totalorder %s127, %s128
      %p139 = scmp.eq.s32.totalorder %s29, 0
      %p140 = por %p138, %p139
      %p141 = scmp.ne.s32.totalorder %s127, %s128
      %p142 = scmp.eq.s32.totalorder %s30, 3
      %p143 = por %p141, %p142
      %p145 = scmp.ne.s32.totalorder %s128, %s144
      %p146 = scmp.eq.s32.totalorder %s30, 0
      %p147 = por %p145, %p146
      %s148 = ssub.s32 %s32, %s39
      %p149 = scmp.eq.s32.totalorder %s148, 0
      %s151 = sadd.s32 %s150, 1
      %s152 = scalar_select %p149, %s150, %s151
      %p155 = pneg %p149
      %p156 = scmp.eq.s32.totalorder %s24, 3
      %p157 = por %p155, %p156
      %p158 = scmp.ne.s32.totalorder %s150, %s153
      %p159 = scmp.eq.s32.totalorder %s24, 0
      %p160 = por %p158, %p159
      %p161 = scmp.ne.s32.totalorder %s150, %s153
      %p162 = scmp.eq.s32.totalorder %s29, 3
      %p163 = por %p161, %p162
      %p164 = scmp.ne.s32.totalorder %s153, %s154
      %p165 = scmp.eq.s32.totalorder %s29, 0
      %p166 = por %p164, %p165
      %p167 = scmp.ne.s32.totalorder %s153, %s154
      %p168 = scmp.eq.s32.totalorder %s30, 3
      %p169 = por %p167, %p168
      %p171 = scmp.ne.s32.totalorder %s154, %s170
      %p172 = scmp.eq.s32.totalorder %s30, 0
      %p173 = por %p171, %p172
      %s174 = ssub.s32 %s31, %s43
      %p175 = scmp.eq.s32.totalorder %s174, 0
      %s177 = sadd.s32 %s176, 1
      %s178 = scalar_select %p175, %s176, %s177
      %p181 = pneg %p175
      %p182 = scmp.eq.s32.totalorder %s24, 3
      %p183 = por %p181, %p182
      %p184 = scmp.ne.s32.totalorder %s176, %s179
      %p185 = scmp.eq.s32.totalorder %s24, 0
      %p186 = por %p184, %p185
      %p187 = scmp.ne.s32.totalorder %s176, %s179
      %p188 = scmp.eq.s32.totalorder %s29, 3
      %p189 = por %p187, %p188
      %p190 = scmp.ne.s32.totalorder %s179, %s180
      %p191 = scmp.eq.s32.totalorder %s29, 0
      %p192 = por %p190, %p191
      %p193 = scmp.ne.s32.totalorder %s179, %s180
      %p194 = scmp.eq.s32.totalorder %s30, 3
      %p195 = por %p193, %p194
      %p197 = scmp.ne.s32.totalorder %s180, %s196
      %p198 = scmp.eq.s32.totalorder %s30, 0
      %p199 = por %p197, %p198
      %p200 = scmp.le.s32.totalorder 1, %s24
      %p201 = scmp.lt.s32.totalorder %s24, 5
      %p202 = pnand %p200, %p201
      %p203 = pneg %p202
      // Predicated region
      $region9: #{tpu_custom_call.1} parent=5 // pred_check
        _
      $region10: #{tpu_custom_call.1} parent=5 // pred_check_branch
        %205 = sbr.rel (%p202) target = $region12
      $region11: #{tpu_custom_call.1} parent=5 // pred_region
        %s206 = ssub.s32 %s24, 1
      $region12: #{tpu_custom_call.1} parent=5 // pred_fallthru
        _
      %p207 = scmp.lt.s32.totalorder %s24, 4
      // Predicated region
      $region13: #{tpu_custom_call.1} parent=5 // pred_check
        %p208 = pneg %p207
      $region14: #{tpu_custom_call.1} parent=5 // pred_check_branch
        %210 = sbr.rel (%p208) target = $region16
      $region15: #{tpu_custom_call.1} parent=5 // pred_region
        // Predicated region
        $region17: #{tpu_custom_call.1} parent=15 // pred_check
          %p211 = pneg %p56
        $region18: #{tpu_custom_call.1} parent=15 // pred_check_branch
          %213 = sbr.rel (%p211) target = $region20
        $region19: #{tpu_custom_call.1} parent=15 // pred_region
          %s214 = sand.u32 %s46, 1
          %s215 = scalar_lea.sflag [#allocation5], %s214
          %s216 = sand.u32 %s46, 1
          %s217 = smul.addr %s216, 192
          %s218 = scalar_lea.vmem [#allocation4], %s217
          %220 = vsyncadd %s215, 0
          %s221 = smul.addr %s32, 48
          %s222 = smul.addr %s221, 4
          %s223 = scalar_lea.hbm %s1, %s222
          %s224 = sshll.u32 %s223, 4
          %s225 = int_to_ptr.hbm [resolvable:$true] %s224
          %s226 = sshll.u32 %s218, 4
          %s227 = int_to_ptr.vmem [resolvable:$true] %s226
          %232 = dma.hbm_to_vmem [thread:$0]  %s225, 3072, %s227, %s215, 192, 192, 12
        $region20: #{tpu_custom_call.1} parent=15 // pred_fallthru
          _
        // Predicated region
        $region21: #{tpu_custom_call.1} parent=15 // pred_check
          %p233 = pneg %p82
        $region22: #{tpu_custom_call.1} parent=15 // pred_check_branch
          %235 = sbr.rel (%p233) target = $region24
        $region23: #{tpu_custom_call.1} parent=15 // pred_region
          %s236 = sand.u32 %s24, 1
          %s237 = scalar_lea.sflag [#allocation8], %s236
          %s238 = sand.u32 %s72, 1
          %s239 = smul.addr %s238, 64
          %s240 = scalar_lea.vmem [#allocation7], %s239
          %242 = vsyncadd %s237, 0
          %s243 = smul.addr %s32, 16
          %s244 = smul.addr %s243, 4
          %s245 = scalar_lea.hbm %s2, %s244
          %s246 = sshll.u32 %s245, 4
          %s247 = int_to_ptr.hbm [resolvable:$true] %s246
          %s248 = sshll.u32 %s240, 4
          %s249 = int_to_ptr.vmem [resolvable:$true] %s248
          %254 = dma.hbm_to_vmem [thread:$0]  %s247, 1024, %s249, %s237, 64, 64, 4
        $region24: #{tpu_custom_call.1} parent=15 // pred_fallthru
          _
        // Predicated region
        $region25: #{tpu_custom_call.1} parent=15 // pred_check
          %p255 = pneg %p108
        $region26: #{tpu_custom_call.1} parent=15 // pred_check_branch
          %257 = sbr.rel (%p255) target = $region28
        $region27: #{tpu_custom_call.1} parent=15 // pred_region
          %s258 = sand.u32 %s24, 1
          %s259 = scalar_lea.sflag [#allocation8], %s258
          %s260 = sand.u32 %s98, 1
          %s261 = smul.addr %s260, 64
          %s262 = scalar_lea.vmem [#allocation9], %s261
          %264 = vsyncadd %s259, 0
          %s265 = smul.addr %s32, 16
          %s266 = smul.addr %s265, 4
          %s267 = scalar_lea.hbm %s3, %s266
          %s268 = sshll.u32 %s267, 4
          %s269 = int_to_ptr.hbm [resolvable:$true] %s268
          %s270 = sshll.u32 %s262, 4
          %s271 = int_to_ptr.vmem [resolvable:$true] %s270
          %276 = dma.hbm_to_vmem [thread:$0]  %s269, 1024, %s271, %s259, 64, 64, 4
        $region28: #{tpu_custom_call.1} parent=15 // pred_fallthru
          _
        // Predicated region
        $region29: #{tpu_custom_call.1} parent=15 // pred_check
          %p277 = pneg %p134
        $region30: #{tpu_custom_call.1} parent=15 // pred_check_branch
          %279 = sbr.rel (%p277) target = $region32
        $region31: #{tpu_custom_call.1} parent=15 // pred_region
          %s280 = sand.u32 %s24, 1
          %s281 = scalar_lea.sflag [#allocation11], %s280
          %s282 = sand.u32 %s124, 1
          %s283 = smul.addr %s282, 64
          %s284 = scalar_lea.vmem [#allocation10], %s283
          %286 = vsyncadd %s281, 0
          %s287 = smul.addr %s32, 16
          %s288 = smul.addr %s287, 4
          %s289 = scalar_lea.hbm %s4, %s288
          %s290 = sshll.u32 %s289, 4
          %s291 = int_to_ptr.hbm [resolvable:$true] %s290
          %s292 = sshll.u32 %s284, 4
          %s293 = int_to_ptr.vmem [resolvable:$true] %s292
          %298 = dma.hbm_to_vmem [thread:$0]  %s291, 1024, %s293, %s281, 64, 64, 4
        $region32: #{tpu_custom_call.1} parent=15 // pred_fallthru
          _
        // Predicated region
        $region33: #{tpu_custom_call.1} parent=15 // pred_check
          %p299 = pneg %p160
        $region34: #{tpu_custom_call.1} parent=15 // pred_check_branch
          %301 = sbr.rel (%p299) target = $region36
        $region35: #{tpu_custom_call.1} parent=15 // pred_region
          %s302 = sand.u32 %s24, 1
          %s303 = scalar_lea.sflag [#allocation11], %s302
          %s304 = sand.u32 %s150, 1
          %s305 = smul.addr %s304, 10
          %s306 = scalar_lea.vmem [#allocation12], %s305
          %308 = vsyncadd %s303, 0
          %s309 = smul.addr %s32, 10
          %s310 = scalar_lea.hbm %s5, %s309
          %s312 = sshll.u32 %s310, 4
          %s313 = int_to_ptr.hbm [resolvable:$true] %s312
          %s314 = sshll.u32 %s306, 4
          %s315 = int_to_ptr.vmem [resolvable:$true] %s314
          %317 = dma.hbm_to_vmem [thread:$0]  %s313, 160, %s315, %s303
        $region36: #{tpu_custom_call.1} parent=15 // pred_fallthru
          _
      $region16: #{tpu_custom_call.1} parent=5 // pred_fallthru
        _
      %p318 = scmp.le.s32.totalorder 1, %s24
      %p319 = scmp.lt.s32.totalorder %s24, 5
      %p320 = pnand %p318, %p319
      %p321 = pneg %p320
      // Predicated region
      $region37: #{tpu_custom_call.1} parent=5 // pred_check
        _
      $region38: #{tpu_custom_call.1} parent=5 // pred_check_branch
        %323 = sbr.rel (%p320) target = $region40
      $region39: #{tpu_custom_call.1} parent=5 // pred_region
        %s324 = ssub.s32 %s24, 1
        %s325 = sand.u32 %s49, 1
        %s326 = scalar_lea.sflag [#allocation5], %s325
        %s327 = sand.u32 %s49, 1
        %s328 = smul.addr %s327, 192
        %s329 = scalar_lea.vmem [#allocation4], %s328
        // Predicated region
        $region41: #{tpu_custom_call.1} parent=39 // pred_check
          %p330 = pneg %p62
        $region42: #{tpu_custom_call.1} parent=39 // pred_check_branch
          %332 = sbr.rel (%p330) target = $region44
        $region43: #{tpu_custom_call.1} parent=39 // pred_region
          %334 = dma.done %s326, 3072
        $region44: #{tpu_custom_call.1} parent=39 // pred_fallthru
          _
        %s335 = sand.u32 %s29, 1
        %s336 = scalar_lea.sflag [#allocation8], %s335
        %s337 = sand.u32 %s75, 1
        %s338 = smul.addr %s337, 64
        %s339 = scalar_lea.vmem [#allocation7], %s338
        // Predicated region
        $region45: #{tpu_custom_call.1} parent=39 // pred_check
          %p340 = pneg %p88
        $region46: #{tpu_custom_call.1} parent=39 // pred_check_branch
          %342 = sbr.rel (%p340) target = $region48
        $region47: #{tpu_custom_call.1} parent=39 // pred_region
          %344 = dma.done %s336, 1024
        $region48: #{tpu_custom_call.1} parent=39 // pred_fallthru
          _
        %s345 = sand.u32 %s29, 1
        %s346 = scalar_lea.sflag [#allocation8], %s345
        %s347 = sand.u32 %s101, 1
        %s348 = smul.addr %s347, 64
        %s349 = scalar_lea.vmem [#allocation9], %s348
        // Predicated region
        $region49: #{tpu_custom_call.1} parent=39 // pred_check
          %p350 = pneg %p114
        $region50: #{tpu_custom_call.1} parent=39 // pred_check_branch
          %352 = sbr.rel (%p350) target = $region52
        $region51: #{tpu_custom_call.1} parent=39 // pred_region
          %354 = dma.done %s346, 1024
        $region52: #{tpu_custom_call.1} parent=39 // pred_fallthru
          _
        %s355 = sand.u32 %s29, 1
        %s356 = scalar_lea.sflag [#allocation11], %s355
        %s357 = sand.u32 %s127, 1
        %s358 = smul.addr %s357, 64
        %s359 = scalar_lea.vmem [#allocation10], %s358
        // Predicated region
        $region53: #{tpu_custom_call.1} parent=39 // pred_check
          %p360 = pneg %p140
        $region54: #{tpu_custom_call.1} parent=39 // pred_check_branch
          %362 = sbr.rel (%p360) target = $region56
        $region55: #{tpu_custom_call.1} parent=39 // pred_region
          %364 = dma.done %s356, 1024
        $region56: #{tpu_custom_call.1} parent=39 // pred_fallthru
          _
        %s365 = sand.u32 %s29, 1
        %s366 = scalar_lea.sflag [#allocation11], %s365
        %s367 = sand.u32 %s153, 1
        %s368 = smul.addr %s367, 10
        %s369 = scalar_lea.vmem [#allocation12], %s368
        // Predicated region
        $region57: #{tpu_custom_call.1} parent=39 // pred_check
          %p370 = pneg %p166
        $region58: #{tpu_custom_call.1} parent=39 // pred_check_branch
          %372 = sbr.rel (%p370) target = $region60
        $region59: #{tpu_custom_call.1} parent=39 // pred_region
          %374 = dma.done %s366, 160
        $region60: #{tpu_custom_call.1} parent=39 // pred_fallthru
          _
        %s375 = sand.u32 %s49, 1
        %s376 = scalar_lea.sflag [#allocation5], %s375
        %s377 = sand.u32 %s49, 1
        %s378 = smul.addr %s377, 192
        %s379 = scalar_lea.vmem [#allocation4], %s378
        %p380 = pneg %p62
        %p381 = pneg %p59
        %s382 = sand.u32 %s29, 1
        %s383 = scalar_lea.sflag [#allocation8], %s382
        %s384 = sand.u32 %s75, 1
        %s385 = smul.addr %s384, 64
        %s386 = scalar_lea.vmem [#allocation7], %s385
        %p387 = pneg %p88
        %p388 = pneg %p85
        %s389 = sand.u32 %s29, 1
        %s390 = scalar_lea.sflag [#allocation8], %s389
        %s391 = sand.u32 %s101, 1
        %s392 = smul.addr %s391, 64
        %s393 = scalar_lea.vmem [#allocation9], %s392
        %p394 = pneg %p114
        %p395 = pneg %p111
        %s396 = sand.u32 %s29, 1
        %s397 = scalar_lea.sflag [#allocation11], %s396
        %s398 = sand.u32 %s127, 1
        %s399 = smul.addr %s398, 64
        %s400 = scalar_lea.vmem [#allocation10], %s399
        %p401 = pneg %p140
        %p402 = pneg %p137
        %s403 = sand.u32 %s29, 1
        %s404 = scalar_lea.sflag [#allocation11], %s403
        %s405 = sand.u32 %s153, 1
        %s406 = smul.addr %s405, 10
        %s407 = scalar_lea.vmem [#allocation12], %s406
        %p408 = pneg %p166
        %p409 = pneg %p163
        %p410 = pneg %p192
        %p411 = pneg %p189
        %s412 = sand.u32 %s179, 1
        %s413 = scalar_lea.sflag [#allocation6], %s412
        %s414 = sand.u32 %s179, 1
        %s415 = smul.addr %s414, 8
        %s416 = scalar_lea.vmem [#allocation13], %s415
        %p418 = scmp.eq.s32.totalorder %s34, 0
        // Predicated region
        $region61: #{tpu_custom_call.1} parent=39 // pred_check
          %p419 = pneg %p418
        $region62: #{tpu_custom_call.1} parent=39 // pred_check_branch
          %421 = sbr.rel (%p419) target = $region64
        $region63: #{tpu_custom_call.1} parent=39 // pred_region
          %s422 = smul.u32 %s33, 8
          %s423 = scalar_lea.hbm %s0, %s422
          // Predicated region
          $region65: #{tpu_custom_call.1} parent=63 // pred_check
            _
          $region66: #{tpu_custom_call.1} parent=63 // pred_check_branch
            %425 = sbr.rel target = $region68
          $region67: #{tpu_custom_call.1} parent=63 // pred_region
            %426 = sst [smem:[#allocation16]] [#allocation15]
            %427 = sst [smem:[#allocation17]] [#allocation14]
          $region68: #{tpu_custom_call.1} parent=63 // pred_fallthru
            _
          %429 = shalt.err (0)
          %s431 = sshll.u32 %s423, 4
          %s432 = int_to_ptr.hbm [resolvable:$true] %s431
          %s433 = sshll.u32 %s416, 4
          %s434 = int_to_ptr.vmem [resolvable:$true] %s433
          %436 = dma.hbm_to_vmem [thread:$0]  %s432, 128, %s434, [#allocation3]
          %s437 = smul.u32 8, 1
          %s438 = sshll.u32 %s437, 4
          %439 = dma.done [#allocation3], %s438
          %440 = vst [vmem:[#allocation2] sm:$0xff] 0.0
        $region64: #{tpu_custom_call.1} parent=39 // pred_fallthru
          _
        %v441 = vld [vmem:[%s416] sm:$0xff]
        %v442 = vlaneseq
        %v443 = vand.u32 %v442, 127
        %vm444 = vcmp.lt.s32.totalorder %v443, 32
        %v445 = vld [vmem:[%s369] sm:$0x7]
        %v446 = vld [vmem:[%s369 + $0x3] sm:$0x1]
        %v447 = vld [vmem:[%s369 + $0x4] sm:$0x1]
        %v448 = vld [vmem:[%s369 + $0x5] sm:$0x1]
        %v449 = vld [vmem:[%s369 + $0x6] sm:$0x1]
        %v450 = vld [vmem:[%s369 + $0x7] sm:$0x1]
        %v451 = vld [vmem:[%s369 + $0x8] sm:$0x1]
        %v452 = vld [vmem:[%s369 + $0x9] sm:$0x1]
        %v453 = vpack.c.bf16 %v441, %v441
        %v454 = vld [vmem:[%s329] sm:$0xff]
        %v455 = vld [vmem:[%s329 + $0x8] sm:$0xf]
        %v456 = vld [vmem:[%s329 + $0xc] sm:$0xff]
        %v457 = vld [vmem:[%s329 + $0x14] sm:$0xf]
        %v458 = vld [vmem:[%s329 + $0x18] sm:$0xff]
        %v459 = vld [vmem:[%s329 + $0x20] sm:$0xf]
        %v460 = vld [vmem:[%s329 + $0x24] sm:$0xff]
        %v461 = vld [vmem:[%s329 + $0x2c] sm:$0xf]
        %v462 = vld [vmem:[%s329 + $0x30] sm:$0xff]
        %v463 = vld [vmem:[%s329 + $0x38] sm:$0xf]
        %v464 = vld [vmem:[%s329 + $0x3c] sm:$0xff]
        %v465 = vld [vmem:[%s329 + $0x44] sm:$0xf]
        %v466 = vld [vmem:[%s329 + $0x48] sm:$0xff]
        %v467 = vld [vmem:[%s329 + $0x50] sm:$0xf]
        %v468 = vld [vmem:[%s329 + $0x54] sm:$0xff]
        %v469 = vld [vmem:[%s329 + $0x5c] sm:$0xf]
        %v470 = vld [vmem:[%s329 + $0x60] sm:$0xff]
        %v471 = vld [vmem:[%s329 + $0x68] sm:$0xf]
        %v472 = vld [vmem:[%s329 + $0x6c] sm:$0xff]
        %v473 = vld [vmem:[%s329 + $0x74] sm:$0xf]
        %v474 = vld [vmem:[%s329 + $0x78] sm:$0xff]
        %v475 = vld [vmem:[%s329 + $0x80] sm:$0xf]
        %v476 = vld [vmem:[%s329 + $0x84] sm:$0xff]
        %v477 = vld [vmem:[%s329 + $0x8c] sm:$0xf]
        %v478 = vld [vmem:[%s329 + $0x90] sm:$0xff]
        %v479 = vld [vmem:[%s329 + $0x98] sm:$0xf]
        %v480 = vld [vmem:[%s329 + $0x9c] sm:$0xff]
        %v481 = vld [vmem:[%s329 + $0xa4] sm:$0xf]
        %v482 = vld [vmem:[%s329 + $0xa8] sm:$0xff]
        %v483 = vld [vmem:[%s329 + $0xb0] sm:$0xf]
        %v484 = vld [vmem:[%s329 + $0xb4] sm:$0xff]
        %v485 = vld [vmem:[%s329 + $0xbc] sm:$0xf]
        %v487 = vperm.slane %v445, 0
        %v488 = vperm.slane %v445, 1
        %v489 = vperm.slane %v445, 2
        %v525 = vunpack.c.l.b16 %v454
        %v526 = vunpack.c.h.b16 %v454
        %v527 = vunpack.c.l.b16 %v455
        %v528 = vunpack.c.l.b16 %v456
        %v529 = vunpack.c.h.b16 %v456
        %v530 = vunpack.c.l.b16 %v457
        %v531 = vunpack.c.l.b16 %v458
        %v532 = vunpack.c.h.b16 %v458
        %v533 = vunpack.c.l.b16 %v459
        %v534 = vunpack.c.l.b16 %v460
        %v535 = vunpack.c.h.b16 %v460
        %v536 = vunpack.c.l.b16 %v461
        %v537 = vunpack.c.l.b16 %v462
        %v538 = vunpack.c.h.b16 %v462
        %v539 = vunpack.c.l.b16 %v463
        %v540 = vunpack.c.l.b16 %v464
        %v541 = vunpack.c.h.b16 %v464
        %v542 = vunpack.c.l.b16 %v465
        %v543 = vunpack.c.l.b16 %v466
        %v544 = vunpack.c.h.b16 %v466
        %v545 = vunpack.c.l.b16 %v467
        %v546 = vunpack.c.l.b16 %v468
        %v547 = vunpack.c.h.b16 %v468
        %v548 = vunpack.c.l.b16 %v469
        %v549 = vunpack.c.l.b16 %v470
        %v550 = vunpack.c.h.b16 %v470
        %v551 = vunpack.c.l.b16 %v471
        %v552 = vunpack.c.l.b16 %v472
        %v553 = vunpack.c.h.b16 %v472
        %v554 = vunpack.c.l.b16 %v473
        %v555 = vunpack.c.l.b16 %v474
        %v556 = vunpack.c.h.b16 %v474
        %v557 = vunpack.c.l.b16 %v475
        %v558 = vunpack.c.l.b16 %v476
        %v559 = vunpack.c.h.b16 %v476
        %v560 = vunpack.c.l.b16 %v477
        %v561 = vunpack.c.l.b16 %v478
        %v562 = vunpack.c.h.b16 %v478
        %v563 = vunpack.c.l.b16 %v479
        %v564 = vunpack.c.l.b16 %v480
        %v565 = vunpack.c.h.b16 %v480
        %v566 = vunpack.c.l.b16 %v481
        %v567 = vunpack.c.l.b16 %v482
        %v568 = vunpack.c.h.b16 %v482
        %v569 = vunpack.c.l.b16 %v483
        %v570 = vunpack.c.l.b16 %v484
        %v571 = vunpack.c.h.b16 %v484
        %v572 = vunpack.c.l.b16 %v485
        %v573 = vpack.c.b16 %v528, %v525
        %v574 = vpack.c.b16 %v529, %v526
        %v575 = vpack.c.b16 %v530, %v527
        %v576 = vpack.c.b16 %v534, %v531
        %v577 = vpack.c.b16 %v535, %v532
        %v578 = vpack.c.b16 %v536, %v533
        %v579 = vpack.c.b16 %v540, %v537
        %v580 = vpack.c.b16 %v541, %v538
        %v581 = vpack.c.b16 %v542, %v539
        %v582 = vpack.c.b16 %v546, %v543
        %v583 = vpack.c.b16 %v547, %v544
        %v584 = vpack.c.b16 %v548, %v545
        %v585 = vpack.c.b16 %v552, %v549
        %v586 = vpack.c.b16 %v553, %v550
        %v587 = vpack.c.b16 %v554, %v551
        %v588 = vpack.c.b16 %v558, %v555
        %v589 = vpack.c.b16 %v559, %v556
        %v590 = vpack.c.b16 %v560, %v557
        %v591 = vpack.c.b16 %v564, %v561
        %v592 = vpack.c.b16 %v565, %v562
        %v593 = vpack.c.b16 %v566, %v563
        %v594 = vpack.c.b16 %v570, %v567
        %v595 = vpack.c.b16 %v571, %v568
        %v596 = vpack.c.b16 %v572, %v569
        %621 = vmatpush.bf16.msra.mxu0 %v594
        %622 = vmatpush.bf16.msra.mxu0 %v591
        %623 = vmatpush.bf16.msra.mxu0 %v588
        %624 = vmatpush.bf16.msra.mxu0 %v585
        %625 = vmatpush.bf16.msra.mxu0 %v582
        %626 = vmatpush.bf16.msra.mxu0 %v579
        %627 = vmatpush.bf16.msra.mxu0 %v576
        %628 = vmatpush.bf16.msra.mxu0 %v573
        %629 = vmatmul.bf16.gmra.mxu0 %v453
        %v630 = vpop.f32.mrf.mxu0
        %v631 = vadd.f32 %v487, %v630
        %v632 = vpop.f32.mrf.mxu0
        %633 = vdwg.mxu0
        %634 = vmatpush.bf16.msra.mxu0 %v595
        %635 = vmatpush.bf16.msra.mxu0 %v592
        %636 = vmatpush.bf16.msra.mxu0 %v589
        %637 = vmatpush.bf16.msra.mxu0 %v586
        %638 = vmatpush.bf16.msra.mxu0 %v583
        %639 = vmatpush.bf16.msra.mxu0 %v580
        %640 = vmatpush.bf16.msra.mxu0 %v577
        %641 = vmatpush.bf16.msra.mxu0 %v574
        %642 = vmatmul.bf16.gmra.mxu0 %v453
        %v643 = vpop.f32.mrf.mxu0
        %v644 = vadd.f32 %v488, %v643
        %v645 = vpop.f32.mrf.mxu0
        %646 = vdwg.mxu0
        %647 = vmatpush.bf16.msra.mxu0 %v596
        %648 = vmatpush.bf16.msra.mxu0 %v593
        %649 = vmatpush.bf16.msra.mxu0 %v590
        %650 = vmatpush.bf16.msra.mxu0 %v587
        %651 = vmatpush.bf16.msra.mxu0 %v584
        %652 = vmatpush.bf16.msra.mxu0 %v581
        %653 = vmatpush.bf16.msra.mxu0 %v578
        %654 = vmatpush.bf16.msra.mxu0 %v575
        %655 = vmatmul.bf16.gmra.mxu0 %v453
        %v656 = vpop.f32.mrf.mxu0
        %v657 = vadd.f32 %v489, %v656
        %v658 = vpop.f32.mrf.mxu0
        %659 = vdwg.mxu0
        %v660 = vpack.c.bf16 %v631, %v631
        %v661 = vpack.c.bf16 %v644, %v644
        %v662 = vpack.c.bf16 %v657, %v657
        %vm663 = vcmask 130048
        %v665 = vsel %vm663, %v660, 0
        %v668 = vsel %vm663, %v661, 0
        %670 = vmatpush.bf16.xpose.msra.mxu0 0
        %671 = vmatpush.bf16.xpose.msra.mxu0 0
        %672 = vmatpush.bf16.xpose.msra.mxu0 0
        %673 = vmatpush.bf16.xpose.msra.mxu0 0
        %674 = vmatpush.bf16.xpose.msra.mxu0 0
        %675 = vmatpush.bf16.xpose.msra.mxu0 0
        %676 = vmatpush.bf16.xpose.msra.mxu0 0
        %677 = vmatpush.bf16.xpose.msra.mxu0 %v668
        %678 = vmatmul.bf16.gmra.mxu0 %v665
        %v679 = vpop.f32.mrf.mxu0
        %v680 = vadd.f32 0.0, %v679
        %v681 = vpop.f32.mrf.mxu0
        %682 = vdwg.mxu0
        %v683 = vmul.f32 %v680, 0.25
        %vm684 = vcmask 64512
        %v685 = vsel %vm684, %v683, -inf
        %686 = vmax.xlane.f32.xlu0 %v685
        %v687 = vpop.xlane.xlu0 %686
        %v688 = vsub.f32 %v683, %v687
        %v689 = vmul.f32 %v688, 1.442695
        %v690 = vpow.pop %v689
        %v691 = vsel %vm684, %v690, 0.0
        %692 = vadd.xlane.f32.xlu0 %v691
        %v693 = vpop.xlane.xlu0 %692
        %v694 = vrcp.pop %v693
        %v695 = vmul.f32 %v690, %v694
        %v696 = vpack.c.bf16 %v695, %v695
        %v698 = vsel %vm684, %v696, 0
        %vm700 = vcmask 1043456
        %v702 = vsel %vm700, %v662, 0
        %704 = vmatpush.bf16.msra.mxu0 0
        %705 = vmatpush.bf16.msra.mxu0 0
        %706 = vmatpush.bf16.msra.mxu0 0
        %707 = vmatpush.bf16.msra.mxu0 0
        %708 = vmatpush.bf16.msra.mxu0 0
        %709 = vmatpush.bf16.msra.mxu0 0
        %710 = vmatpush.bf16.msra.mxu0 0
        %711 = vmatpush.bf16.msra.mxu0 %v702
        %712 = vmatmul.bf16.gmra.mxu0 %v698
        %v713 = vpop.f32.mrf.mxu0
        %v714 = vadd.f32 0.0, %v713
        %v715 = vpop.f32.mrf.mxu0
        %716 = vdwg.mxu0
        %717 = vst.msk [vmem:[#allocation2] sm:$0xff] %vm663, %v714
        %v719 = vunpack.c.l.b16 %v660
        %v720 = vpack.c.b16 %v719, %v719
        %721 = vrot.lane.b32.xlu0 %v720, 112
        %v722 = vpop.permute.xlu0 %721
        %v724 = vunpack.c.l.b16 %v661
        %v725 = vpack.c.b16 %v724, %v724
        %726 = vrot.lane.b32.xlu0 %v725, 112
        %v727 = vpop.permute.xlu0 %726
        %v729 = vsel %vm663, %v722, 0
        %v732 = vsel %vm663, %v727, 0
        %734 = vmatpush.bf16.xpose.msra.mxu0 0
        %735 = vmatpush.bf16.xpose.msra.mxu0 0
        %736 = vmatpush.bf16.xpose.msra.mxu0 0
        %737 = vmatpush.bf16.xpose.msra.mxu0 0
        %738 = vmatpush.bf16.xpose.msra.mxu0 0
        %739 = vmatpush.bf16.xpose.msra.mxu0 0
        %740 = vmatpush.bf16.xpose.msra.mxu0 0
        %741 = vmatpush.bf16.xpose.msra.mxu0 %v732
        %742 = vmatmul.bf16.gmra.mxu0 %v729
        %v743 = vpop.f32.mrf.mxu0
        %v744 = vadd.f32 0.0, %v743
        %v745 = vpop.f32.mrf.mxu0
        %746 = vdwg.mxu0
        %v747 = vmul.f32 %v744, 0.25
        %v748 = vsel %vm684, %v747, -inf
        %749 = vmax.xlane.f32.xlu0 %v748
        %v750 = vpop.xlane.xlu0 %749
        %v751 = vsub.f32 %v747, %v750
        %v752 = vmul.f32 %v751, 1.442695
        %v753 = vpow.pop %v752
        %v754 = vsel %vm684, %v753, 0.0
        %755 = vadd.xlane.f32.xlu0 %v754
        %v756 = vpop.xlane.xlu0 %755
        %v757 = vrcp.pop %v756
        %v758 = vmul.f32 %v753, %v757
        %v759 = vpack.c.bf16 %v758, %v758
        %v761 = vunpack.c.l.b16 %v662
        %v762 = vpack.c.b16 %v761, %v761
        %763 = vrot.lane.b32.xlu0 %v762, 112
        %v764 = vpop.permute.xlu0 %763
        %v766 = vsel %vm684, %v759, 0
        %v769 = vsel %vm700, %v764, 0
        %771 = vmatpush.bf16.msra.mxu0 0
        %772 = vmatpush.bf16.msra.mxu0 0
        %773 = vmatpush.bf16.msra.mxu0 0
        %774 = vmatpush.bf16.msra.mxu0 0
        %775 = vmatpush.bf16.msra.mxu0 0
        %776 = vmatpush.bf16.msra.mxu0 0
        %777 = vmatpush.bf16.msra.mxu0 0
        %778 = vmatpush.bf16.msra.mxu0 %v769
        %779 = vmatmul.bf16.gmra.mxu0 %v766
        %v780 = vpop.f32.mrf.mxu0
        %v781 = vadd.f32 0.0, %v780
        %v782 = vpop.f32.mrf.mxu0
        %783 = vdwg.mxu0
        %785 = vrot.lane.b32.xlu0 %v781, 16
        %v786 = vpop.permute.xlu0 %785
        %vm788 = vcmask 261248
        %789 = vst.msk [vmem:[#allocation2] sm:$0xff] %vm788, %v786
        %v790 = vld [vmem:[#allocation2] sm:$0xff]
        %v791 = vpack.c.bf16 %v790, %v790
        %v792 = vld [vmem:[%s339] sm:$0xf]
        %v793 = vld [vmem:[%s339 + $0x4] sm:$0xf]
        %v794 = vld [vmem:[%s339 + $0x8] sm:$0xf]
        %v795 = vld [vmem:[%s339 + $0xc] sm:$0xf]
        %v796 = vld [vmem:[%s339 + $0x10] sm:$0xf]
        %v797 = vld [vmem:[%s339 + $0x14] sm:$0xf]
        %v798 = vld [vmem:[%s339 + $0x18] sm:$0xf]
        %v799 = vld [vmem:[%s339 + $0x1c] sm:$0xf]
        %v800 = vld [vmem:[%s339 + $0x20] sm:$0xf]
        %v801 = vld [vmem:[%s339 + $0x24] sm:$0xf]
        %v802 = vld [vmem:[%s339 + $0x28] sm:$0xf]
        %v803 = vld [vmem:[%s339 + $0x2c] sm:$0xf]
        %v804 = vld [vmem:[%s339 + $0x30] sm:$0xf]
        %v805 = vld [vmem:[%s339 + $0x34] sm:$0xf]
        %v806 = vld [vmem:[%s339 + $0x38] sm:$0xf]
        %v807 = vld [vmem:[%s339 + $0x3c] sm:$0xf]
        %v809 = vperm.slane %v446, 0
        %v827 = vunpack.c.l.b16 %v792
        %v828 = vunpack.c.l.b16 %v793
        %v829 = vunpack.c.l.b16 %v794
        %v830 = vunpack.c.l.b16 %v795
        %v831 = vunpack.c.l.b16 %v796
        %v832 = vunpack.c.l.b16 %v797
        %v833 = vunpack.c.l.b16 %v798
        %v834 = vunpack.c.l.b16 %v799
        %v835 = vunpack.c.l.b16 %v800
        %v836 = vunpack.c.l.b16 %v801
        %v837 = vunpack.c.l.b16 %v802
        %v838 = vunpack.c.l.b16 %v803
        %v839 = vunpack.c.l.b16 %v804
        %v840 = vunpack.c.l.b16 %v805
        %v841 = vunpack.c.l.b16 %v806
        %v842 = vunpack.c.l.b16 %v807
        %v843 = vpack.c.b16 %v828, %v827
        %v844 = vpack.c.b16 %v830, %v829
        %v845 = vpack.c.b16 %v832, %v831
        %v846 = vpack.c.b16 %v834, %v833
        %v847 = vpack.c.b16 %v836, %v835
        %v848 = vpack.c.b16 %v838, %v837
        %v849 = vpack.c.b16 %v840, %v839
        %v850 = vpack.c.b16 %v842, %v841
        %859 = vmatpush.bf16.msra.mxu0 %v850
        %860 = vmatpush.bf16.msra.mxu0 %v849
        %861 = vmatpush.bf16.msra.mxu0 %v848
        %862 = vmatpush.bf16.msra.mxu0 %v847
        %863 = vmatpush.bf16.msra.mxu0 %v846
        %864 = vmatpush.bf16.msra.mxu0 %v845
        %865 = vmatpush.bf16.msra.mxu0 %v844
        %866 = vmatpush.bf16.msra.mxu0 %v843
        %867 = vmatmul.bf16.gmra.mxu0 %v791
        %v868 = vpop.f32.mrf.mxu0
        %v869 = vadd.f32 %v809, %v868
        %v870 = vpop.f32.mrf.mxu0
        %871 = vdwg.mxu0
        %v872 = vadd.f32 %v441, %v869
        %873 = vadd.xlane.f32.xlu0 %v872
        %v874 = vpop.xlane.xlu0 %873
        %v875 = vmul.f32 %v874, 0.03125
        %v876 = vsub.f32 %v872, %v875
        %v877 = vsel %vm444, 1, 0
        %vm878 = vcmp.eq.s32.totalorder %v877, 1
        %v879 = vsel %vm878, %v876, 0.0
        %v880 = vmul.f32 %v879, %v879
        %881 = vadd.xlane.f32.xlu0 %v880
        %v882 = vpop.xlane.xlu0 %881
        %v883 = vmul.f32 %v882, 0.03125
        %v884 = vadd.f32 %v883, 1e-06
        %v885 = vrsqrt.pop %v884
        %v886 = vmul.f32 %v885, %v884
        %v887 = vmul.f32 %v886, %v885
        %v888 = vmul.f32 0.5, %v887
        %v889 = vsub.f32 1.5, %v888
        %v890 = vmul.f32 %v885, %v889
        %vm891 = vweird.f32 %v884
        %vm892 = vweird.f32 %v885
        %vm893 = vmor %vm891, %vm892
        %v894 = vsel %vm893, %v885, %v890
        %v895 = vmul.f32 %v876, %v894
        %v897 = vperm.slane %v447, 0
        %v899 = vmul.f32 %v895, %v897
        %v901 = vperm.slane %v448, 0
        %v903 = vadd.f32 %v899, %v901
        %v904 = vpack.c.bf16 %v903, %v903
        %v905 = vld [vmem:[%s349] sm:$0xf]
        %v906 = vld [vmem:[%s349 + $0x4] sm:$0xf]
        %v907 = vld [vmem:[%s349 + $0x8] sm:$0xf]
        %v908 = vld [vmem:[%s349 + $0xc] sm:$0xf]
        %v909 = vld [vmem:[%s349 + $0x10] sm:$0xf]
        %v910 = vld [vmem:[%s349 + $0x14] sm:$0xf]
        %v911 = vld [vmem:[%s349 + $0x18] sm:$0xf]
        %v912 = vld [vmem:[%s349 + $0x1c] sm:$0xf]
        %v913 = vld [vmem:[%s349 + $0x20] sm:$0xf]
        %v914 = vld [vmem:[%s349 + $0x24] sm:$0xf]
        %v915 = vld [vmem:[%s349 + $0x28] sm:$0xf]
        %v916 = vld [vmem:[%s349 + $0x2c] sm:$0xf]
        %v917 = vld [vmem:[%s349 + $0x30] sm:$0xf]
        %v918 = vld [vmem:[%s349 + $0x34] sm:$0xf]
        %v919 = vld [vmem:[%s349 + $0x38] sm:$0xf]
        %v920 = vld [vmem:[%s349 + $0x3c] sm:$0xf]
        %v922 = vperm.slane %v449, 0
        %v940 = vunpack.c.l.b16 %v905
        %v941 = vunpack.c.l.b16 %v906
        %v942 = vunpack.c.l.b16 %v907
        %v943 = vunpack.c.l.b16 %v908
        %v944 = vunpack.c.l.b16 %v909
        %v945 = vunpack.c.l.b16 %v910
        %v946 = vunpack.c.l.b16 %v911
        %v947 = vunpack.c.l.b16 %v912
        %v948 = vunpack.c.l.b16 %v913
        %v949 = vunpack.c.l.b16 %v914
        %v950 = vunpack.c.l.b16 %v915
        %v951 = vunpack.c.l.b16 %v916
        %v952 = vunpack.c.l.b16 %v917
        %v953 = vunpack.c.l.b16 %v918
        %v954 = vunpack.c.l.b16 %v919
        %v955 = vunpack.c.l.b16 %v920
        %v956 = vpack.c.b16 %v941, %v940
        %v957 = vpack.c.b16 %v943, %v942
        %v958 = vpack.c.b16 %v945, %v944
        %v959 = vpack.c.b16 %v947, %v946
        %v960 = vpack.c.b16 %v949, %v948
        %v961 = vpack.c.b16 %v951, %v950
        %v962 = vpack.c.b16 %v953, %v952
        %v963 = vpack.c.b16 %v955, %v954
        %972 = vmatpush.bf16.msra.mxu0 %v963
        %973 = vmatpush.bf16.msra.mxu0 %v962
        %974 = vmatpush.bf16.msra.mxu0 %v961
        %975 = vmatpush.bf16.msra.mxu0 %v960
        %976 = vmatpush.bf16.msra.mxu0 %v959
        %977 = vmatpush.bf16.msra.mxu0 %v958
        %978 = vmatpush.bf16.msra.mxu0 %v957
        %979 = vmatpush.bf16.msra.mxu0 %v956
        %980 = vmatmul.bf16.gmra.mxu0 %v904
        %v981 = vpop.f32.mrf.mxu0
        %v982 = vadd.f32 %v922, %v981
        %v983 = vpop.f32.mrf.mxu0
        %984 = vdwg.mxu0
        %v985 = vmul.f32 %v982, 0.5
        %v986 = vmul.f32 %v982, 0.044715
        %v987 = vmul.f32 %v986, %v982
        %v988 = vmul.f32 %v987, %v982
        %v989 = vadd.f32 %v982, %v988
        %v990 = vmul.f32 %v989, 0.7978846
        %v991 = vtanh.pop %v990
        %v992 = vadd.f32 %v991, 1.0
        %v993 = vmul.f32 %v985, %v992
        %v994 = vpack.c.bf16 %v993, %v993
        %v995 = vld [vmem:[%s359] sm:$0xf]
        %v996 = vld [vmem:[%s359 + $0x4] sm:$0xf]
        %v997 = vld [vmem:[%s359 + $0x8] sm:$0xf]
        %v998 = vld [vmem:[%s359 + $0xc] sm:$0xf]
        %v999 = vld [vmem:[%s359 + $0x10] sm:$0xf]
        %v1000 = vld [vmem:[%s359 + $0x14] sm:$0xf]
        %v1001 = vld [vmem:[%s359 + $0x18] sm:$0xf]
        %v1002 = vld [vmem:[%s359 + $0x1c] sm:$0xf]
        %v1003 = vld [vmem:[%s359 + $0x20] sm:$0xf]
        %v1004 = vld [vmem:[%s359 + $0x24] sm:$0xf]
        %v1005 = vld [vmem:[%s359 + $0x28] sm:$0xf]
        %v1006 = vld [vmem:[%s359 + $0x2c] sm:$0xf]
        %v1007 = vld [vmem:[%s359 + $0x30] sm:$0xf]
        %v1008 = vld [vmem:[%s359 + $0x34] sm:$0xf]
        %v1009 = vld [vmem:[%s359 + $0x38] sm:$0xf]
        %v1010 = vld [vmem:[%s359 + $0x3c] sm:$0xf]
        %v1012 = vperm.slane %v450, 0
        %v1030 = vunpack.c.l.b16 %v995
        %v1031 = vunpack.c.l.b16 %v996
        %v1032 = vunpack.c.l.b16 %v997
        %v1033 = vunpack.c.l.b16 %v998
        %v1034 = vunpack.c.l.b16 %v999
        %v1035 = vunpack.c.l.b16 %v1000
        %v1036 = vunpack.c.l.b16 %v1001
        %v1037 = vunpack.c.l.b16 %v1002
        %v1038 = vunpack.c.l.b16 %v1003
        %v1039 = vunpack.c.l.b16 %v1004
        %v1040 = vunpack.c.l.b16 %v1005
        %v1041 = vunpack.c.l.b16 %v1006
        %v1042 = vunpack.c.l.b16 %v1007
        %v1043 = vunpack.c.l.b16 %v1008
        %v1044 = vunpack.c.l.b16 %v1009
        %v1045 = vunpack.c.l.b16 %v1010
        %v1046 = vpack.c.b16 %v1031, %v1030
        %v1047 = vpack.c.b16 %v1033, %v1032
        %v1048 = vpack.c.b16 %v1035, %v1034
        %v1049 = vpack.c.b16 %v1037, %v1036
        %v1050 = vpack.c.b16 %v1039, %v1038
        %v1051 = vpack.c.b16 %v1041, %v1040
        %v1052 = vpack.c.b16 %v1043, %v1042
        %v1053 = vpack.c.b16 %v1045, %v1044
        %1062 = vmatpush.bf16.msra.mxu0 %v1053
        %1063 = vmatpush.bf16.msra.mxu0 %v1052
        %1064 = vmatpush.bf16.msra.mxu0 %v1051
        %1065 = vmatpush.bf16.msra.mxu0 %v1050
        %1066 = vmatpush.bf16.msra.mxu0 %v1049
        %1067 = vmatpush.bf16.msra.mxu0 %v1048
        %1068 = vmatpush.bf16.msra.mxu0 %v1047
        %1069 = vmatpush.bf16.msra.mxu0 %v1046
        %1070 = vmatmul.bf16.gmra.mxu0 %v994
        %v1071 = vpop.f32.mrf.mxu0
        %v1072 = vadd.f32 %v1012, %v1071
        %v1073 = vpop.f32.mrf.mxu0
        %1074 = vdwg.mxu0
        %v1075 = vadd.f32 %v903, %v1072
        %1076 = vadd.xlane.f32.xlu0 %v1075
        %v1077 = vpop.xlane.xlu0 %1076
        %v1078 = vmul.f32 %v1077, 0.03125
        %v1079 = vsub.f32 %v1075, %v1078
        %v1080 = vsel %vm878, %v1079, 0.0
        %v1081 = vmul.f32 %v1080, %v1080
        %1082 = vadd.xlane.f32.xlu0 %v1081
        %v1083 = vpop.xlane.xlu0 %1082
        %v1084 = vmul.f32 %v1083, 0.03125
        %v1085 = vadd.f32 %v1084, 1e-06
        %v1086 = vrsqrt.pop %v1085
        %v1087 = vmul.f32 %v1086, %v1085
        %v1088 = vmul.f32 %v1087, %v1086
        %v1089 = vmul.f32 0.5, %v1088
        %v1090 = vsub.f32 1.5, %v1089
        %v1091 = vmul.f32 %v1086, %v1090
        %vm1092 = vweird.f32 %v1085
        %vm1093 = vweird.f32 %v1086
        %vm1094 = vmor %vm1092, %vm1093
        %v1095 = vsel %vm1094, %v1086, %v1091
        %v1096 = vmul.f32 %v1079, %v1095
        %v1098 = vperm.slane %v451, 0
        %v1100 = vmul.f32 %v1096, %v1098
        %v1102 = vperm.slane %v452, 0
        %v1104 = vadd.f32 %v1100, %v1102
        %1105 = vst [vmem:[%s416] sm:$0xff] %v1104
        %s1106 = sand.u32 %s179, 1
        %s1107 = scalar_lea.sflag [#allocation6], %s1106
        %s1108 = sand.u32 %s179, 1
        %s1109 = smul.addr %s1108, 8
        %s1110 = scalar_lea.vmem [#allocation13], %s1109
        // Predicated region
        $region69: #{tpu_custom_call.1} parent=39 // pred_check
          %p1111 = pneg %p189
        $region70: #{tpu_custom_call.1} parent=39 // pred_check_branch
          %1113 = sbr.rel (%p1111) target = $region72
        $region71: #{tpu_custom_call.1} parent=39 // pred_region
          %1115 = vsyncadd %s1107, 0
          %s1116 = smul.addr %s33, 8
          %s1117 = scalar_lea.hbm %s6, %s1116
          %s1119 = sshll.u32 %s1110, 4
          %s1120 = int_to_ptr.vmem [resolvable:$true] %s1119
          %s1121 = sshll.u32 %s1117, 4
          %s1122 = int_to_ptr.hbm [resolvable:$true] %s1121
          %1124 = dma.vmem_to_hbm [thread:$0]  %s1120, 128, %s1122, %s1107
        $region72: #{tpu_custom_call.1} parent=39 // pred_fallthru
          _
      $region40: #{tpu_custom_call.1} parent=5 // pred_fallthru
        _
      %p1125 = scmp.le.s32.totalorder 2, %s24
      // Predicated region
      $region73: #{tpu_custom_call.1} parent=5 // pred_check
        %p1126 = pneg %p1125
      $region74: #{tpu_custom_call.1} parent=5 // pred_check_branch
        %1128 = sbr.rel (%p1126) target = $region76
      $region75: #{tpu_custom_call.1} parent=5 // pred_region
        %s1129 = ssub.s32 %s24, 2
        // Predicated region
        $region77: #{tpu_custom_call.1} parent=75 // pred_check
          %p1130 = pneg %p195
        $region78: #{tpu_custom_call.1} parent=75 // pred_check_branch
          %1132 = sbr.rel (%p1130) target = $region80
        $region79: #{tpu_custom_call.1} parent=75 // pred_region
          %s1133 = sand.u32 %s180, 1
          %s1134 = scalar_lea.sflag [#allocation6], %s1133
          %s1135 = sand.u32 %s180, 1
          %s1136 = smul.addr %s1135, 8
          %s1137 = scalar_lea.vmem [#allocation13], %s1136
          %1139 = dma.done %s1134, 128
        $region80: #{tpu_custom_call.1} parent=75 // pred_fallthru
          _
      $region76: #{tpu_custom_call.1} parent=5 // pred_fallthru
        _
    $region6: #{tpu_custom_call.1} parent=1 // loop_footer
      %s28 = sadd.s32 1, %s24
    $region7: #{tpu_custom_call.1} parent=1 // loop_footer_branch
      %23 = sbr.rel target = $region3
    $region8: #{tpu_custom_call.1} parent=1 // loop_exit
      _
    %1140 = vsyncpa [#allocation5], 1
    %s1141 = scalar_lea.sflag [#allocation5], 1
    %1142 = vsyncpa %s1141, 1
    %1143 = vsyncpa [#allocation8], 1
    %s1144 = scalar_lea.sflag [#allocation8], 1
    %1145 = vsyncpa %s1144, 1
    %1146 = vsyncpa [#allocation11], 1
    %s1147 = scalar_lea.sflag [#allocation11], 1
    %1148 = vsyncpa %s1147, 1
    %1149 = vsyncpa [#allocation6], 1
    %s1150 = scalar_lea.sflag [#allocation6], 1
    %1151 = vsyncpa %s1150, 1
  %1152 = vsyncmov [#allocation3]
  %s1153 = vpop.sfrf %1152
  %p1154 = scmp.eq.s32.totalorder %s1153, 0
  %p1155 = pneg %p1154
  %1157 = shalt.err (%p1155)

</llo_original>
